<compile_context>
chip_gen: v7x
topology: tpu7x:2x2x1
jax: 0.10.0
libtpu: 0.0.40
codegen_flags: <defaults>
</compile_context>

<pallas_src>
import inspect

import jax
import jax.numpy as jnp
from jax.experimental import pallas as pl
from jax.experimental.pallas import tpu as pltpu


def _round_up(x, m):
    return ((x + m - 1) // m) * m


def _pipeline_mode_supported():
    """True if this JAX exposes pl.Buffered + BlockSpec(pipeline_mode=...)."""
    if not hasattr(pl, "Buffered"):
        return False
    try:
        return "pipeline_mode" in inspect.signature(pl.BlockSpec).parameters
    except (TypeError, ValueError):
        return False


_PIPELINE_MODE_SUPPORTED = _pipeline_mode_supported()


def mlp_kernel(x_ref,
               w1_ref, b1_ref,
               w2_ref, b2_ref,
               w3_ref, b3_ref,
               w4_ref, b4_ref,
               w5_ref, b5_ref,
               o_ref):
    """Fused forward of SimpleNN1 for one batch tile (eval mode: dropout == identity).

    Dots run on the MXU with bf16 inputs and f32 accumulation; bias add + ReLU
    stay in f32 (v5e's VPU has no bf16 ALU path; neutral on v6e/v7x).
    """

    def layer(h, w_ref, b_ref, relu):
        # h is already bf16 for layer 1 (cast done in the wrapper -> astype is
        # a no-op); later layers cast their f32 activations to bf16 here.
        acc = jnp.dot(h.astype(w_ref.dtype), w_ref[...],
                      preferred_element_type=jnp.float32)
        acc = acc + b_ref[...]
        return jnp.maximum(acc, 0.0) if relu else acc

    h = x_ref[...]                        # (TB, F) bf16
    h = layer(h, w1_ref, b1_ref, True)    # fc1 + ReLU   (dropout == identity)
    h = layer(h, w2_ref, b2_ref, True)    # fc2 + ReLU
    h = layer(h, w3_ref, b3_ref, True)    # fc3 + ReLU
    h = layer(h, w4_ref, b4_ref, True)    # fc4 + ReLU
    h = layer(h, w5_ref, b5_ref, False)   # fc5 (logits, lane-padded to 128)
    o_ref[...] = h.astype(o_ref.dtype)
    # TODO(synk): training-mode Dropout(0.5) (pltpu.prng_random_bits mask + 2x
    # scale) intentionally not implemented; eval-mode identity matches .eval().


def _forward_padded(x_pad, flat_params, tb, nc_pad, single_buffer_weights):
    """Run the kernel on an already batch-padded, weight-prepped argument list."""
    b_pad, feat = x_pad.shape
    grid = (b_pad // tb,)

    def resident_spec(shape):
        # Full-array block, same block every grid step -> stays in VMEM.
        idx = lambda i: (0,) * len(shape)
        if single_buffer_weights:
            # Block index never changes; double-buffering would only waste VMEM.
            return pl.BlockSpec(shape, idx, pipeline_mode=pl.Buffered(1))
        return pl.BlockSpec(shape, idx)

    in_specs = [pl.BlockSpec((tb, feat), lambda i: (i, 0))]
    in_specs += [resident_spec(p.shape) for p in flat_params]
    out_spec = pl.BlockSpec((tb, nc_pad), lambda i: (i, 0))

    # Advisory cost estimate for XLA's scheduler around the custom call.
    weight_elems = sum(p.shape[0] * p.shape[1] for p in flat_params[0::2])
    param_bytes = sum(p.size * p.dtype.itemsize for p in flat_params)
    cost = pl.CostEstimate(
        flops=2 * b_pad * weight_elems,
        transcendentals=0,
        bytes_accessed=(x_pad.size * x_pad.dtype.itemsize
                        + b_pad * nc_pad * 4
                        + param_bytes),
    )

    compiler_params = pltpu.CompilerParams(
        dimension_semantics=("parallel",),
        # Only needed for big tiles (relevant on v7x: 64 MiB physical VMEM,
        # 32 MiB default scoped limit); leave the default for small tiles.
        vmem_limit_bytes=(48 * 1024 * 1024 if tb >= 512 else None),
    )

    return pl.pallas_call(
        mlp_kernel,
        out_shape=jax.ShapeDtypeStruct((b_pad, nc_pad), jnp.float32),
        grid_spec=pltpu.PrefetchScalarGridSpec(
            num_scalar_prefetch=0,
            grid=grid,
            in_specs=in_specs,
            out_specs=out_spec,
        ),
        compiler_params=compiler_params,
        cost_estimate=cost,
    )(x_pad, *flat_params)


def simple_nn1_forward(x, params, *, block_batch=1024):
    """params = [(W1,b1), ..., (W5,b5)] with W_k shaped (in_k, out_k), b_k (1, out_k).

    Returns f32 logits of shape (B, num_classes).
    """
    B, _ = x.shape
    num_classes = params[-1][0].shape[1]
    nc_pad = _round_up(num_classes, 128)

    # bf16 weights (half footprint, full-rate MXU), f32 biases.
    prepped = []
    for li, (W, b) in enumerate(params):
        Wc = W.astype(jnp.bfloat16)
        bc = b.astype(jnp.float32).reshape(1, -1)
        if li == len(params) - 1 and nc_pad != num_classes:
            # Lane-pad the final layer so the output block is 128-wide
            # (unmasked vst writeback); extra columns are zero and sliced off.
            Wc = jnp.pad(Wc, ((0, 0), (0, nc_pad - num_classes)))
            bc = jnp.pad(bc, ((0, 0), (0, nc_pad - num_classes)))
        prepped.extend([Wc, bc])

    # Batch tile: multiple of 16 (bf16 sublane packing), capped at block_batch;
    # zero-pad B to a multiple of it so every grid step is a full aligned tile.
    tb = min(_round_up(block_batch, 16), _round_up(B, 16))
    B_pad = _round_up(B, tb)
    # v7x has 2 TensorCores: make sure the "parallel" batch grid has >=2 tiles
    # for mid/large batches so both cores get work (no-op on v5e/v6e).
    if B_pad // tb < 2 and tb >= 32 and tb % 32 == 0:
        tb //= 2

    # bf16 input: halves the x HBM->VMEM DMA and skips the in-kernel layer-1
    # cast; the dot truncated x to bf16 anyway, so numerics are unchanged.
    x_pad = x.astype(jnp.bfloat16)
    if B_pad != B:
        x_pad = jnp.pad(x_pad, ((0, B_pad - B), (0, 0)))

    if _PIPELINE_MODE_SUPPORTED:
        try:
            out = _forward_padded(x_pad, prepped, tb, nc_pad, True)
        except (TypeError, ValueError, NotImplementedError,
                pltpu.LoweringException):
            # Only the pipeline_mode=pl.Buffered(1) request differs from the
            # plain path; retry double-buffered.  Any genuine shape/lowering
            # bug fails again here and propagates instead of being swallowed.
            out = _forward_padded(x_pad, prepped, tb, nc_pad, False)
    else:
        out = _forward_padded(x_pad, prepped, tb, nc_pad, False)

    return out[:B, :num_classes]


def init_linear(key, fan_in, fan_out):
    """PyTorch nn.Linear-style init (U[-1/sqrt(in), 1/sqrt(in)]), weight stored (in, out)."""
    k_w, k_b = jax.random.split(key)
    bound = 1.0 / jnp.sqrt(jnp.float32(fan_in))
    W = jax.random.uniform(k_w, (fan_in, fan_out), jnp.float32, -bound, bound)
    b = jax.random.uniform(k_b, (1, fan_out), jnp.float32, -bound, bound)
    return W, b


def make_params(key, input_size, num_classes):
    sizes = [input_size, 1024, 512, 256, 128, num_classes]
    keys = jax.random.split(key, len(sizes) - 1)
    return [init_linear(k, sizes[i], sizes[i + 1]) for i, k in enumerate(keys)]


def reference_forward(x, params):
    """Pure-JAX reference mirroring the kernel's math (bf16 dot inputs, f32 acc)."""
    h = x.astype(jnp.float32)
    for i, (W, b) in enumerate(params):
        acc = jnp.dot(h.astype(jnp.bfloat16), W.astype(jnp.bfloat16),
                      preferred_element_type=jnp.float32) + b.reshape(1, -1)
        h = jnp.maximum(acc, 0.0) if i < len(params) - 1 else acc
    return h


if __name__ == "__main__":
    # Shapes consistent with the module: frames of 39-dim MFCC features
    # (LibriDataset-style), 41 phoneme classes.
    input_size = 39
    num_classes = 41

    root = jax.random.PRNGKey(0)
    k_x1, k_x2, k_p = jax.random.split(root, 3)

    params = make_params(k_p, input_size, num_classes)

    # 1) Tiny batch: exercises the minimum 16-row tile, batch zero-padding,
    #    lane-padding of the logits, and the [:B, :num_classes] slice.
    x_small = jax.random.normal(k_x1, (8, input_size), dtype=jnp.float32)
    out_small = jax.block_until_ready(simple_nn1_forward(x_small, params))
    ref_small = reference_forward(x_small, params)
    assert out_small.shape == (8, num_classes)
    assert jnp.allclose(out_small, ref_small, atol=2e-2, rtol=2e-2), float(
        jnp.max(jnp.abs(out_small - ref_small)))

    # 2) Multi-tile batch: exercises grid > 1 over the batch and padding to a
    #    multiple of the tile (200 rows, 64-row tiles -> 4 grid steps).
    x_big = jax.random.normal(k_x2, (200, input_size), dtype=jnp.float32)
    out_big = jax.block_until_ready(
        simple_nn1_forward(x_big, params, block_batch=64))
    ref_big = reference_forward(x_big, params)
    assert out_big.shape == (200, num_classes)
    assert jnp.allclose(out_big, ref_big, atol=2e-2, rtol=2e-2), float(
        jnp.max(jnp.abs(out_big - ref_big)))

    print("KERNEL_OK")
</pallas_src>

<mosaic_0001>
module attributes {stable_mosaic.version = 11 : i64} {
  func.func @mlp_kernel(%arg0: i32, %arg1: memref<16x39xbf16, #tpu.memory_space<vmem>>, %arg2: memref<39x1024xbf16, #tpu.memory_space<vmem>>, %arg3: memref<1x1024xf32, #tpu.memory_space<vmem>>, %arg4: memref<1024x512xbf16, #tpu.memory_space<vmem>>, %arg5: memref<1x512xf32, #tpu.memory_space<vmem>>, %arg6: memref<512x256xbf16, #tpu.memory_space<vmem>>, %arg7: memref<1x256xf32, #tpu.memory_space<vmem>>, %arg8: memref<256x128xbf16, #tpu.memory_space<vmem>>, %arg9: memref<1x128xf32, #tpu.memory_space<vmem>>, %arg10: memref<128x128xbf16, #tpu.memory_space<vmem>>, %arg11: memref<1x128xf32, #tpu.memory_space<vmem>>, %arg12: memref<16x128xf32, #tpu.memory_space<vmem>>) attributes {dimension_semantics = [#tpu.dimension_semantics<parallel>], iteration_bounds = array<i64: 1>, scalar_prefetch = 0 : i64, scratch_operands = 0 : i64, tpu.core_type = #tpu.core_type<tc>, window_params = [{transform_indices = @transform_0, window_bounds = array<i64: 16, 39>}, {pipeline_mode = #tpu.pipeline_mode<synchronous>, transform_indices = @transform_1, window_bounds = array<i64: 39, 1024>}, {pipeline_mode = #tpu.pipeline_mode<synchronous>, transform_indices = @transform_2, window_bounds = array<i64: 1, 1024>}, {pipeline_mode = #tpu.pipeline_mode<synchronous>, transform_indices = @transform_3, window_bounds = array<i64: 1024, 512>}, {pipeline_mode = #tpu.pipeline_mode<synchronous>, transform_indices = @transform_4, window_bounds = array<i64: 1, 512>}, {pipeline_mode = #tpu.pipeline_mode<synchronous>, transform_indices = @transform_5, window_bounds = array<i64: 512, 256>}, {pipeline_mode = #tpu.pipeline_mode<synchronous>, transform_indices = @transform_6, window_bounds = array<i64: 1, 256>}, {pipeline_mode = #tpu.pipeline_mode<synchronous>, transform_indices = @transform_7, window_bounds = array<i64: 256, 128>}, {pipeline_mode = #tpu.pipeline_mode<synchronous>, transform_indices = @transform_8, window_bounds = array<i64: 1, 128>}, {pipeline_mode = #tpu.pipeline_mode<synchronous>, transform_indices = @transform_9, window_bounds = array<i64: 128, 128>}, {pipeline_mode = #tpu.pipeline_mode<synchronous>, transform_indices = @transform_10, window_bounds = array<i64: 1, 128>}, {transform_indices = @transform_11, window_bounds = array<i64: 16, 128>}]} {
    %c0 = arith.constant 0 : index
    %c0_0 = arith.constant 0 : index
    %0 = vector.load %arg1[%c0, %c0_0] : memref<16x39xbf16, #tpu.memory_space<vmem>>, vector<16x39xbf16>
    %c0_1 = arith.constant 0 : index
    %c0_2 = arith.constant 0 : index
    %1 = vector.load %arg2[%c0_1, %c0_2] : memref<39x1024xbf16, #tpu.memory_space<vmem>>, vector<39x1024xbf16>
    %cst = arith.constant dense<0.000000e+00> : vector<16x1024xf32>
    %2 = tpu.matmul %0, %1, %cst {dimension_numbers = #tpu.dot_dimension_numbers<[1], [0], [0], [1], [0, 0, 1, 1], [], []>} : vector<16x39xbf16>, vector<39x1024xbf16>, vector<16x1024xf32> -> vector<16x1024xf32>
    %c0_3 = arith.constant 0 : index
    %c0_4 = arith.constant 0 : index
    %3 = vector.load %arg3[%c0_3, %c0_4] : memref<1x1024xf32, #tpu.memory_space<vmem>>, vector<1x1024xf32>
    %4 = vector.broadcast %3 : vector<1x1024xf32> to vector<16x1024xf32>
    %5 = arith.addf %2, %4 : vector<16x1024xf32>
    %cst_5 = arith.constant 0.000000e+00 : f32
    %6 = vector.broadcast %cst_5 : f32 to vector<16x1024xf32>
    %7 = arith.maximumf %5, %6 : vector<16x1024xf32>
    %8 = arith.truncf %7 : vector<16x1024xf32> to vector<16x1024xbf16>
    %c0_6 = arith.constant 0 : index
    %c0_7 = arith.constant 0 : index
    %9 = vector.load %arg4[%c0_6, %c0_7] : memref<1024x512xbf16, #tpu.memory_space<vmem>>, vector<1024x512xbf16>
    %cst_8 = arith.constant dense<0.000000e+00> : vector<16x512xf32>
    %10 = tpu.matmul %8, %9, %cst_8 {dimension_numbers = #tpu.dot_dimension_numbers<[1], [0], [0], [1], [0, 0, 1, 1], [], []>} : vector<16x1024xbf16>, vector<1024x512xbf16>, vector<16x512xf32> -> vector<16x512xf32>
    %c0_9 = arith.constant 0 : index
    %c0_10 = arith.constant 0 : index
    %11 = vector.load %arg5[%c0_9, %c0_10] : memref<1x512xf32, #tpu.memory_space<vmem>>, vector<1x512xf32>
    %12 = vector.broadcast %11 : vector<1x512xf32> to vector<16x512xf32>
    %13 = arith.addf %10, %12 : vector<16x512xf32>
    %cst_11 = arith.constant 0.000000e+00 : f32
    %14 = vector.broadcast %cst_11 : f32 to vector<16x512xf32>
    %15 = arith.maximumf %13, %14 : vector<16x512xf32>
    %16 = arith.truncf %15 : vector<16x512xf32> to vector<16x512xbf16>
    %c0_12 = arith.constant 0 : index
    %c0_13 = arith.constant 0 : index
    %17 = vector.load %arg6[%c0_12, %c0_13] : memref<512x256xbf16, #tpu.memory_space<vmem>>, vector<512x256xbf16>
    %cst_14 = arith.constant dense<0.000000e+00> : vector<16x256xf32>
    %18 = tpu.matmul %16, %17, %cst_14 {dimension_numbers = #tpu.dot_dimension_numbers<[1], [0], [0], [1], [0, 0, 1, 1], [], []>} : vector<16x512xbf16>, vector<512x256xbf16>, vector<16x256xf32> -> vector<16x256xf32>
    %c0_15 = arith.constant 0 : index
    %c0_16 = arith.constant 0 : index
    %19 = vector.load %arg7[%c0_15, %c0_16] : memref<1x256xf32, #tpu.memory_space<vmem>>, vector<1x256xf32>
    %20 = vector.broadcast %19 : vector<1x256xf32> to vector<16x256xf32>
    %21 = arith.addf %18, %20 : vector<16x256xf32>
    %cst_17 = arith.constant 0.000000e+00 : f32
    %22 = vector.broadcast %cst_17 : f32 to vector<16x256xf32>
    %23 = arith.maximumf %21, %22 : vector<16x256xf32>
    %24 = arith.truncf %23 : vector<16x256xf32> to vector<16x256xbf16>
    %c0_18 = arith.constant 0 : index
    %c0_19 = arith.constant 0 : index
    %25 = vector.load %arg8[%c0_18, %c0_19] : memref<256x128xbf16, #tpu.memory_space<vmem>>, vector<256x128xbf16>
    %cst_20 = arith.constant dense<0.000000e+00> : vector<16x128xf32>
    %26 = tpu.matmul %24, %25, %cst_20 {dimension_numbers = #tpu.dot_dimension_numbers<[1], [0], [0], [1], [0, 0, 1, 1], [], []>} : vector<16x256xbf16>, vector<256x128xbf16>, vector<16x128xf32> -> vector<16x128xf32>
    %c0_21 = arith.constant 0 : index
    %c0_22 = arith.constant 0 : index
    %27 = vector.load %arg9[%c0_21, %c0_22] : memref<1x128xf32, #tpu.memory_space<vmem>>, vector<1x128xf32>
    %28 = vector.broadcast %27 : vector<1x128xf32> to vector<16x128xf32>
    %29 = arith.addf %26, %28 : vector<16x128xf32>
    %cst_23 = arith.constant 0.000000e+00 : f32
    %30 = vector.broadcast %cst_23 : f32 to vector<16x128xf32>
    %31 = arith.maximumf %29, %30 : vector<16x128xf32>
    %32 = arith.truncf %31 : vector<16x128xf32> to vector<16x128xbf16>
    %c0_24 = arith.constant 0 : index
    %c0_25 = arith.constant 0 : index
    %33 = vector.load %arg10[%c0_24, %c0_25] : memref<128x128xbf16, #tpu.memory_space<vmem>>, vector<128x128xbf16>
    %cst_26 = arith.constant dense<0.000000e+00> : vector<16x128xf32>
    %34 = tpu.matmul %32, %33, %cst_26 {dimension_numbers = #tpu.dot_dimension_numbers<[1], [0], [0], [1], [0, 0, 1, 1], [], []>} : vector<16x128xbf16>, vector<128x128xbf16>, vector<16x128xf32> -> vector<16x128xf32>
    %c0_27 = arith.constant 0 : index
    %c0_28 = arith.constant 0 : index
    %35 = vector.load %arg11[%c0_27, %c0_28] : memref<1x128xf32, #tpu.memory_space<vmem>>, vector<1x128xf32>
    %36 = vector.broadcast %35 : vector<1x128xf32> to vector<16x128xf32>
    %37 = arith.addf %34, %36 : vector<16x128xf32>
    %c0_29 = arith.constant 0 : index
    %c0_30 = arith.constant 0 : index
    %38 = vector.load %arg12[%c0_29, %c0_30] : memref<16x128xf32, #tpu.memory_space<vmem>>, vector<16x128xf32>
    tpu.vector_store %arg12[%c0_29, %c0_30], %37 {strides = array<i32>} : memref<16x128xf32, #tpu.memory_space<vmem>>, vector<16x128xf32>,
    return
  }
  func.func @transform_0(%arg0: i32) -> (i32, i32) {
    %c0_i32 = arith.constant 0 : i32
    %c0_i32_0 = arith.constant 0 : i32
    return %arg0, %c0_i32 : i32, i32
  }
  func.func @transform_1(%arg0: i32) -> (i32, i32) {
    %c0_i32 = arith.constant 0 : i32
    %c0_i32_0 = arith.constant 0 : i32
    %c0_i32_1 = arith.constant 0 : i32
    return %c0_i32, %c0_i32_0 : i32, i32
  }
  func.func @transform_2(%arg0: i32) -> (i32, i32) {
    %c0_i32 = arith.constant 0 : i32
    %c0_i32_0 = arith.constant 0 : i32
    %c0_i32_1 = arith.constant 0 : i32
    return %c0_i32, %c0_i32_0 : i32, i32
  }
  func.func @transform_3(%arg0: i32) -> (i32, i32) {
    %c0_i32 = arith.constant 0 : i32
    %c0_i32_0 = arith.constant 0 : i32
    %c0_i32_1 = arith.constant 0 : i32
    return %c0_i32, %c0_i32_0 : i32, i32
  }
  func.func @transform_4(%arg0: i32) -> (i32, i32) {
    %c0_i32 = arith.constant 0 : i32
    %c0_i32_0 = arith.constant 0 : i32
    %c0_i32_1 = arith.constant 0 : i32
    return %c0_i32, %c0_i32_0 : i32, i32
  }
  func.func @transform_5(%arg0: i32) -> (i32, i32) {
    %c0_i32 = arith.constant 0 : i32
    %c0_i32_0 = arith.constant 0 : i32
    %c0_i32_1 = arith.constant 0 : i32
    return %c0_i32, %c0_i32_0 : i32, i32
  }
  func.func @transform_6(%arg0: i32) -> (i32, i32) {
    %c0_i32 = arith.constant 0 : i32
    %c0_i32_0 = arith.constant 0 : i32
    %c0_i32_1 = arith.constant 0 : i32
    return %c0_i32, %c0_i32_0 : i32, i32
  }
  func.func @transform_7(%arg0: i32) -> (i32, i32) {
    %c0_i32 = arith.constant 0 : i32
    %c0_i32_0 = arith.constant 0 : i32
    %c0_i32_1 = arith.constant 0 : i32
    return %c0_i32, %c0_i32_0 : i32, i32
  }
  func.func @transform_8(%arg0: i32) -> (i32, i32) {
    %c0_i32 = arith.constant 0 : i32
    %c0_i32_0 = arith.constant 0 : i32
    %c0_i32_1 = arith.constant 0 : i32
    return %c0_i32, %c0_i32_0 : i32, i32
  }
  func.func @transform_9(%arg0: i32) -> (i32, i32) {
    %c0_i32 = arith.constant 0 : i32
    %c0_i32_0 = arith.constant 0 : i32
    %c0_i32_1 = arith.constant 0 : i32
    return %c0_i32, %c0_i32_0 : i32, i32
  }
  func.func @transform_10(%arg0: i32) -> (i32, i32) {
    %c0_i32 = arith.constant 0 : i32
    %c0_i32_0 = arith.constant 0 : i32
    %c0_i32_1 = arith.constant 0 : i32
    return %c0_i32, %c0_i32_0 : i32, i32
  }
  func.func @transform_11(%arg0: i32) -> (i32, i32) {
    %c0_i32 = arith.constant 0 : i32
    %c0_i32_0 = arith.constant 0 : i32
    return %arg0, %c0_i32 : i32, i32
  }
}

</mosaic_0001>

<llo_original>
// kernel: tpu_custom_call.1
$region0: #{tpu_custom_call.1}
  #allocation0 [shape = 'u32[]', space=smem, size = 0x4, offset = 0x4, fixed_abs, tag = 'smem constant byte address 0x4 - core index']
  #allocation1 [shape = 'u32[144,128]{1,0:T(1,128)}', space=vmem, size = 0x12000, scoped, tag = 'internal scratch']
  %s0 = inlined_call_operand.hbm [shape: bf16[16,39], index: 0, kind: input, shape index: {}]
  %s1 = inlined_call_operand.hbm [shape: bf16[39,1024], index: 1, kind: input, shape index: {}]
  %s2 = inlined_call_operand.hbm [shape: f32[1,1024], index: 2, kind: input, shape index: {}]
  %s3 = inlined_call_operand.hbm [shape: bf16[1024,512], index: 3, kind: input, shape index: {}]
  %s4 = inlined_call_operand.vmem [shape: f32[1,512], index: 4, kind: input, shape index: {}]
  %s5 = inlined_call_operand.hbm [shape: bf16[512,256], index: 5, kind: input, shape index: {}]
  %s6 = inlined_call_operand.vmem [shape: f32[1,256], index: 6, kind: input, shape index: {}]
  %s7 = inlined_call_operand.hbm [shape: bf16[256,128], index: 7, kind: input, shape index: {}]
  %s8 = inlined_call_operand.vmem [shape: f32[1,128], index: 8, kind: input, shape index: {}]
  %s9 = inlined_call_operand.hbm [shape: bf16[128,128], index: 9, kind: input, shape index: {}]
  %s10 = inlined_call_operand.vmem [shape: f32[1,128], index: 10, kind: input, shape index: {}]
  %s11 = inlined_call_operand.hbm [shape: f32[16,128], index: 11, kind: output, shape index: {}]
  %s12 = sld [smem:[#allocation0]]
  $region82: #{tpu_custom_call.1} parent=0
    _
  %s14 = ssub.s32 1, %s12
  %s15 = scalar_select 0, %s14, %s12
  $region1: #{tpu_custom_call.1} parent=0
    #allocation2 [shape = 'u8[4096]{0}', space=vmem, size = 0x1000, scoped, tag = 'input window, operand 0, single buffered']
    #allocation3 [shape = 's32[1]{0}', space=sflag, size = 0x4, scoped, tag = 'scoped memory for tpu_custom_call.1']
    #allocation4 [shape = 's32[1]{0}', space=sflag, size = 0x4, scoped, tag = 'scoped memory for tpu_custom_call.1']
    #allocation5 [shape = 'u8[81920]{0}', space=vmem, size = 0x14000, scoped, tag = 'input window, operand 1, single buffered']
    #allocation6 [shape = 's32[1]{0}', space=sflag, size = 0x4, scoped, tag = 'scoped memory for tpu_custom_call.1']
    #allocation7 [shape = 'u8[4096]{0}', space=vmem, size = 0x1000, scoped, tag = 'input window, operand 2, single buffered']
    #allocation8 [shape = 'u8[1048576]{0}', space=vmem, size = 0x100000, scoped, tag = 'input window, operand 3, single buffered']
    #allocation9 [shape = 's32[1]{0}', space=sflag, size = 0x4, scoped, tag = 'scoped memory for tpu_custom_call.1']
    #allocation10 [shape = 'u8[262144]{0}', space=vmem, size = 0x40000, scoped, tag = 'input window, operand 5, single buffered']
    #allocation11 [shape = 'u8[65536]{0}', space=vmem, size = 0x10000, scoped, tag = 'input window, operand 7, single buffered']
    #allocation12 [shape = 's32[1]{0}', space=sflag, size = 0x4, scoped, tag = 'scoped memory for tpu_custom_call.1']
    #allocation13 [shape = 'u8[32768]{0}', space=vmem, size = 0x8000, scoped, tag = 'input window, operand 9, single buffered']
    #allocation14 [shape = 'u8[8192]{0}', space=vmem, size = 0x2000, scoped, tag = 'output window, operand 0, single buffered']
    %16 = vsyncpa [#allocation3], 0
    %17 = vsyncpa [#allocation6], 0
    %18 = vsyncpa [#allocation9], 0
    %19 = vsyncpa [#allocation12], 0
    %20 = vsyncpa [#allocation4], 0
    // Predicated region
    $region2: #{tpu_custom_call.1} parent=1 // pred_check
      _
    $region3: #{tpu_custom_call.1} parent=1 // pred_check_branch
      %22 = sbr.rel (0) target = $region5
    $region4: #{tpu_custom_call.1} parent=1 // pred_region
      %s24 = ssub.s32 128, 128
      %25 = vsyncadd [#allocation3], %s24
      %s26 = sshll.u32 [#allocation2], 4
      %s27 = int_to_ptr.vmem [resolvable:$true] %s26
      %32 = dma.hbm_to_vmem [thread:$0]  %s0, 128, %s27, [#allocation3], 64, 64, 4
    $region5: #{tpu_custom_call.1} parent=1 // pred_fallthru
      _
    // Predicated region
    $region6: #{tpu_custom_call.1} parent=1 // pred_check
      _
    $region7: #{tpu_custom_call.1} parent=1 // pred_check_branch
      %34 = sbr.rel (0) target = $region9
    $region8: #{tpu_custom_call.1} parent=1 // pred_region
      %s36 = ssub.s32 2560, 2560
      %37 = vsyncadd [#allocation6], %s36
      %s38 = sshll.u32 [#allocation5], 4
      %s39 = int_to_ptr.vmem [resolvable:$true] %s38
      %44 = dma.hbm_to_vmem [thread:$0]  %s1, 2560, %s39, [#allocation6], 512, 512, 32
    $region9: #{tpu_custom_call.1} parent=1 // pred_fallthru
      _
    // Predicated region
    $region10: #{tpu_custom_call.1} parent=1 // pred_check
      _
    $region11: #{tpu_custom_call.1} parent=1 // pred_check_branch
      %46 = sbr.rel (0) target = $region13
    $region12: #{tpu_custom_call.1} parent=1 // pred_region
      %s48 = ssub.s32 128, 128
      %49 = vsyncadd [#allocation6], %s48
      %s51 = sshll.u32 [#allocation7], 4
      %s52 = int_to_ptr.vmem [resolvable:$true] %s51
      %54 = dma.hbm_to_vmem [thread:$0]  %s2, 128, %s52, [#allocation6]
    $region13: #{tpu_custom_call.1} parent=1 // pred_fallthru
      _
    // Predicated region
    $region14: #{tpu_custom_call.1} parent=1 // pred_check
      _
    $region15: #{tpu_custom_call.1} parent=1 // pred_check_branch
      %56 = sbr.rel (0) target = $region17
    $region16: #{tpu_custom_call.1} parent=1 // pred_region
      %s58 = ssub.s32 32768, 32768
      %59 = vsyncadd [#allocation9], %s58
      %s60 = sshll.u32 [#allocation8], 4
      %s61 = int_to_ptr.vmem [resolvable:$true] %s60
      %66 = dma.hbm_to_vmem [thread:$0]  %s3, 32768, %s61, [#allocation9], 256, 256, 16
    $region17: #{tpu_custom_call.1} parent=1 // pred_fallthru
      _
    // Predicated region
    $region18: #{tpu_custom_call.1} parent=1 // pred_check
      _
    $region19: #{tpu_custom_call.1} parent=1 // pred_check_branch
      %68 = sbr.rel (0) target = $region21
    $region20: #{tpu_custom_call.1} parent=1 // pred_region
      _
    $region21: #{tpu_custom_call.1} parent=1 // pred_fallthru
      _
    // Predicated region
    $region22: #{tpu_custom_call.1} parent=1 // pred_check
      _
    $region23: #{tpu_custom_call.1} parent=1 // pred_check_branch
      %70 = sbr.rel (0) target = $region25
    $region24: #{tpu_custom_call.1} parent=1 // pred_region
      %s72 = ssub.s32 8192, 8192
      %73 = vsyncadd [#allocation9], %s72
      %s74 = sshll.u32 [#allocation10], 4
      %s75 = int_to_ptr.vmem [resolvable:$true] %s74
      %80 = dma.hbm_to_vmem [thread:$0]  %s5, 8192, %s75, [#allocation9], 128, 128, 8
    $region25: #{tpu_custom_call.1} parent=1 // pred_fallthru
      _
    // Predicated region
    $region26: #{tpu_custom_call.1} parent=1 // pred_check
      _
    $region27: #{tpu_custom_call.1} parent=1 // pred_check_branch
      %82 = sbr.rel (0) target = $region29
    $region28: #{tpu_custom_call.1} parent=1 // pred_region
      _
    $region29: #{tpu_custom_call.1} parent=1 // pred_fallthru
      _
    // Predicated region
    $region30: #{tpu_custom_call.1} parent=1 // pred_check
      _
    $region31: #{tpu_custom_call.1} parent=1 // pred_check_branch
      %84 = sbr.rel (0) target = $region33
    $region32: #{tpu_custom_call.1} parent=1 // pred_region
      %s86 = ssub.s32 2048, 2048
      %87 = vsyncadd [#allocation12], %s86
      %s88 = sshll.u32 [#allocation11], 4
      %s89 = int_to_ptr.vmem [resolvable:$true] %s88
      %94 = dma.hbm_to_vmem [thread:$0]  %s7, 2048, %s89, [#allocation12], 64, 64, 4
    $region33: #{tpu_custom_call.1} parent=1 // pred_fallthru
      _
    // Predicated region
    $region34: #{tpu_custom_call.1} parent=1 // pred_check
      _
    $region35: #{tpu_custom_call.1} parent=1 // pred_check_branch
      %96 = sbr.rel (0) target = $region37
    $region36: #{tpu_custom_call.1} parent=1 // pred_region
      _
    $region37: #{tpu_custom_call.1} parent=1 // pred_fallthru
      _
    // Predicated region
    $region38: #{tpu_custom_call.1} parent=1 // pred_check
      _
    $region39: #{tpu_custom_call.1} parent=1 // pred_check_branch
      %98 = sbr.rel (0) target = $region41
    $region40: #{tpu_custom_call.1} parent=1 // pred_region
      %s100 = ssub.s32 1024, 1024
      %101 = vsyncadd [#allocation12], %s100
      %s102 = sshll.u32 [#allocation13], 4
      %s103 = int_to_ptr.vmem [resolvable:$true] %s102
      %108 = dma.hbm_to_vmem [thread:$0]  %s9, 1024, %s103, [#allocation12], 64, 64, 4
    $region41: #{tpu_custom_call.1} parent=1 // pred_fallthru
      _
    // Predicated region
    $region42: #{tpu_custom_call.1} parent=1 // pred_check
      _
    $region43: #{tpu_custom_call.1} parent=1 // pred_check_branch
      %110 = sbr.rel (0) target = $region45
    $region44: #{tpu_custom_call.1} parent=1 // pred_region
      _
    $region45: #{tpu_custom_call.1} parent=1 // pred_fallthru
      _
    // Predicated region
    $region46: #{tpu_custom_call.1} parent=1 // pred_check
      _
    $region47: #{tpu_custom_call.1} parent=1 // pred_check_branch
      %112 = sbr.rel (0) target = $region49
    $region48: #{tpu_custom_call.1} parent=1 // pred_region
      %113 = dma.done [#allocation3], 128
    $region49: #{tpu_custom_call.1} parent=1 // pred_fallthru
      _
    // Predicated region
    $region50: #{tpu_custom_call.1} parent=1 // pred_check
      _
    $region51: #{tpu_custom_call.1} parent=1 // pred_check_branch
      %115 = sbr.rel (0) target = $region53
    $region52: #{tpu_custom_call.1} parent=1 // pred_region
      %116 = dma.done [#allocation6], 2560
    $region53: #{tpu_custom_call.1} parent=1 // pred_fallthru
      _
    // Predicated region
    $region54: #{tpu_custom_call.1} parent=1 // pred_check
      _
    $region55: #{tpu_custom_call.1} parent=1 // pred_check_branch
      %118 = sbr.rel (0) target = $region57
    $region56: #{tpu_custom_call.1} parent=1 // pred_region
      %119 = dma.done [#allocation6], 128
    $region57: #{tpu_custom_call.1} parent=1 // pred_fallthru
      _
    // Predicated region
    $region58: #{tpu_custom_call.1} parent=1 // pred_check
      _
    $region59: #{tpu_custom_call.1} parent=1 // pred_check_branch
      %121 = sbr.rel (0) target = $region61
    $region60: #{tpu_custom_call.1} parent=1 // pred_region
      %122 = dma.done [#allocation9], 32768
    $region61: #{tpu_custom_call.1} parent=1 // pred_fallthru
      _
    // Predicated region
    $region62: #{tpu_custom_call.1} parent=1 // pred_check
      _
    $region63: #{tpu_custom_call.1} parent=1 // pred_check_branch
      %124 = sbr.rel (0) target = $region65
    $region64: #{tpu_custom_call.1} parent=1 // pred_region
      %125 = dma.done [#allocation9], 8192
    $region65: #{tpu_custom_call.1} parent=1 // pred_fallthru
      _
    // Predicated region
    $region66: #{tpu_custom_call.1} parent=1 // pred_check
      _
    $region67: #{tpu_custom_call.1} parent=1 // pred_check_branch
      %127 = sbr.rel (0) target = $region69
    $region68: #{tpu_custom_call.1} parent=1 // pred_region
      %128 = dma.done [#allocation12], 2048
    $region69: #{tpu_custom_call.1} parent=1 // pred_fallthru
      _
    // Predicated region
    $region70: #{tpu_custom_call.1} parent=1 // pred_check
      _
    $region71: #{tpu_custom_call.1} parent=1 // pred_check_branch
      %130 = sbr.rel (0) target = $region73
    $region72: #{tpu_custom_call.1} parent=1 // pred_region
      %131 = dma.done [#allocation12], 1024
    $region73: #{tpu_custom_call.1} parent=1 // pred_fallthru
      _
    %v133 = vld [vmem:[#allocation2] sm:$0xf]
    %v134 = vld [vmem:[#allocation2 + $0x4] sm:$0xf]
    %v135 = vld [vmem:[#allocation5] sm:$0xff]
    %v136 = vld [vmem:[#allocation5 + $0x8] sm:$0xff]
    %v137 = vld [vmem:[#allocation5 + $0x10] sm:$0xff]
    %v138 = vld [vmem:[#allocation5 + $0x18] sm:$0xff]
    %v139 = vld [vmem:[#allocation5 + $0x20] sm:$0xff]
    %v140 = vld [vmem:[#allocation5 + $0x28] sm:$0xff]
    %v141 = vld [vmem:[#allocation5 + $0x30] sm:$0xff]
    %v142 = vld [vmem:[#allocation5 + $0x38] sm:$0xff]
    %v143 = vld [vmem:[#allocation5 + $0x40] sm:$0xff]
    %v144 = vld [vmem:[#allocation5 + $0x48] sm:$0xff]
    %v145 = vld [vmem:[#allocation5 + $0x50] sm:$0xff]
    %v146 = vld [vmem:[#allocation5 + $0x58] sm:$0xff]
    %v147 = vld [vmem:[#allocation5 + $0x60] sm:$0xff]
    %v148 = vld [vmem:[#allocation5 + $0x68] sm:$0xff]
    %v149 = vld [vmem:[#allocation5 + $0x70] sm:$0xff]
    %v150 = vld [vmem:[#allocation5 + $0x78] sm:$0xff]
    %v151 = vld [vmem:[#allocation5 + $0x80] sm:$0xff]
    %v152 = vld [vmem:[#allocation5 + $0x88] sm:$0xff]
    %v153 = vld [vmem:[#allocation5 + $0x90] sm:$0xff]
    %v154 = vld [vmem:[#allocation5 + $0x98] sm:$0xff]
    %v155 = vld [vmem:[#allocation7] sm:$0xff]
    %v157 = vlaneseq
    %v158 = vshrl.u32 %v157, 7
    %v159 = vsub.s32 0, %v158
    %v160 = vrot.slane %v155, %v159
    %v161 = vlaneseq
    %v162 = vshrl.u32 %v161, 7
    %v163 = vsub.s32 1, %v162
    %v164 = vrot.slane %v155, %v163
    %v165 = vlaneseq
    %v166 = vshrl.u32 %v165, 7
    %v167 = vsub.s32 2, %v166
    %v168 = vrot.slane %v155, %v167
    %v169 = vlaneseq
    %v170 = vshrl.u32 %v169, 7
    %v171 = vsub.s32 3, %v170
    %v172 = vrot.slane %v155, %v171
    %v173 = vlaneseq
    %v174 = vshrl.u32 %v173, 7
    %v175 = vsub.s32 4, %v174
    %v176 = vrot.slane %v155, %v175
    %v177 = vlaneseq
    %v178 = vshrl.u32 %v177, 7
    %v179 = vsub.s32 5, %v178
    %v180 = vrot.slane %v155, %v179
    %v181 = vlaneseq
    %v182 = vshrl.u32 %v181, 7
    %v183 = vsub.s32 6, %v182
    %v184 = vrot.slane %v155, %v183
    %v185 = vlaneseq
    %v186 = vshrl.u32 %v185, 7
    %v187 = vsub.s32 7, %v186
    %v188 = vrot.slane %v155, %v187
    %v199 = vunpack.c.l.b16 %v133
    %v200 = vunpack.c.l.b16 %v134
    %v201 = vpack.c.b16 %v200, %v199
    %v222 = vunpack.c.l.b16 %v135
    %v223 = vunpack.c.h.b16 %v135
    %v224 = vunpack.c.l.b16 %v136
    %v225 = vunpack.c.h.b16 %v136
    %v226 = vunpack.c.l.b16 %v137
    %v227 = vunpack.c.h.b16 %v137
    %v228 = vunpack.c.l.b16 %v138
    %v229 = vunpack.c.h.b16 %v138
    %v230 = vunpack.c.l.b16 %v139
    %v231 = vunpack.c.h.b16 %v139
    %v232 = vunpack.c.l.b16 %v140
    %v233 = vunpack.c.h.b16 %v140
    %v234 = vunpack.c.l.b16 %v141
    %v235 = vunpack.c.h.b16 %v141
    %v236 = vunpack.c.l.b16 %v142
    %v237 = vunpack.c.h.b16 %v142
    %v238 = vunpack.c.l.b16 %v143
    %v239 = vunpack.c.h.b16 %v143
    %v240 = vunpack.c.l.b16 %v144
    %v241 = vunpack.c.h.b16 %v144
    %v242 = vunpack.c.l.b16 %v145
    %v243 = vunpack.c.h.b16 %v145
    %v244 = vunpack.c.l.b16 %v146
    %v245 = vunpack.c.h.b16 %v146
    %v246 = vunpack.c.l.b16 %v147
    %v247 = vunpack.c.h.b16 %v147
    %v248 = vunpack.c.l.b16 %v148
    %v249 = vunpack.c.h.b16 %v148
    %v250 = vunpack.c.l.b16 %v149
    %v251 = vunpack.c.h.b16 %v149
    %v252 = vunpack.c.l.b16 %v150
    %v253 = vunpack.c.h.b16 %v150
    %v254 = vunpack.c.l.b16 %v151
    %v255 = vunpack.c.h.b16 %v151
    %v256 = vunpack.c.l.b16 %v152
    %v257 = vunpack.c.h.b16 %v152
    %v258 = vunpack.c.l.b16 %v153
    %v259 = vunpack.c.h.b16 %v153
    %v260 = vunpack.c.l.b16 %v154
    %v261 = vunpack.c.h.b16 %v154
    %v262 = vpack.c.b16 %v230, %v222
    %v263 = vpack.c.b16 %v231, %v223
    %v264 = vpack.c.b16 %v232, %v224
    %v265 = vpack.c.b16 %v233, %v225
    %v266 = vpack.c.b16 %v234, %v226
    %v267 = vpack.c.b16 %v235, %v227
    %v268 = vpack.c.b16 %v236, %v228
    %v269 = vpack.c.b16 %v237, %v229
    %v270 = vpack.c.b16 %v246, %v238
    %v271 = vpack.c.b16 %v247, %v239
    %v272 = vpack.c.b16 %v248, %v240
    %v273 = vpack.c.b16 %v249, %v241
    %v274 = vpack.c.b16 %v250, %v242
    %v275 = vpack.c.b16 %v251, %v243
    %v276 = vpack.c.b16 %v252, %v244
    %v277 = vpack.c.b16 %v253, %v245
    %v278 = vpack.c.b16 %v254, %v254
    %v279 = vpack.c.b16 %v255, %v255
    %v280 = vpack.c.b16 %v256, %v256
    %v281 = vpack.c.b16 %v257, %v257
    %v282 = vpack.c.b16 %v258, %v258
    %v283 = vpack.c.b16 %v259, %v259
    %v284 = vpack.c.b16 %v260, %v260
    %v285 = vpack.c.b16 %v261, %v261
    %vm302 = vcmask 318464
    %v304 = vsel %vm302, %v201, 0
    %vm306 = vcmask 1042432
    %vm307 = vcmask 1043456
    %v308 = vsel %vm306, 4294967295, 65535
    %v309 = vsel %vm307, %v308, 0
    %v311 = vand.u32 %v278, %v309
    %v314 = vand.u32 %v279, %v309
    %v317 = vand.u32 %v280, %v309
    %v320 = vand.u32 %v281, %v309
    %v323 = vand.u32 %v282, %v309
    %v326 = vand.u32 %v283, %v309
    %v329 = vand.u32 %v284, %v309
    %v332 = vand.u32 %v285, %v309
    %334 = vmatprep.subr.bf16.mxu0 %v263
    %335 = vmatpush1.bf16.msra.mxu0 %v262
    %336 = vmatprep.subr.bf16.mxu0 %v271
    %337 = vmatpush1.bf16.msra.mxu0 %v270
    %338 = vmatprep.subr.bf16.mxu0 %v314
    %339 = vmatpush1.bf16.msra.mxu0 %v311
    %340 = vmatprep.subr.bf16.mxu0 0
    %341 = vmatpush1.bf16.msra.mxu0 0
    %342 = vmatprep.subr.bf16.mxu0 0
    %343 = vmatpush1.bf16.msra.mxu0 0
    %344 = vmatprep.subr.bf16.mxu0 0
    %345 = vmatpush1.bf16.msra.mxu0 0
    %346 = vmatprep.subr.bf16.mxu0 0
    %347 = vmatpush1.bf16.msra.mxu0 0
    %348 = vmatprep.subr.bf16.mxu0 0
    %349 = vmatpush1.bf16.msra.mxu0 0
    %350 = vmatprep.subr.bf16.mxu0 0
    %351 = vmatpush1.bf16.msra.mxu0 0
    %352 = vmatprep.subr.bf16.mxu0 0
    %353 = vmatpush1.bf16.msra.mxu0 0
    %354 = vmatprep.subr.bf16.mxu0 0
    %355 = vmatpush1.bf16.msra.mxu0 0
    %356 = vmatprep.subr.bf16.mxu0 0
    %357 = vmatpush1.bf16.msra.mxu0 0
    %358 = vmatprep.subr.bf16.mxu0 0
    %359 = vmatpush1.bf16.msra.mxu0 0
    %360 = vmatprep.subr.bf16.mxu0 0
    %361 = vmatpush1.bf16.msra.mxu0 0
    %362 = vmatprep.subr.bf16.mxu0 0
    %363 = vmatpush1.bf16.msra.mxu0 0
    %364 = vmatprep.subr.bf16.mxu0 0
    %365 = vmatpush1.bf16.msra.mxu0 0
    %366 = vmatprep.mubr.bf16.mxu0 0
    %367 = vmatmul.mubr.bf16.gmra.mrb[0].mxu0 %v304
    %v368 = vpop.f32.mrb[0].mxu0
    %v369 = vadd.f32 %v160, %v368
    %v370 = vpop.f32.mrb[0].mxu0
    %v371 = vadd.f32 %v164, %v370
    %v372 = vpop.f32.mrb[0].mxu0
    %v373 = vadd.f32 %v160, %v372
    %v374 = vpop.f32.mrb[0].mxu0
    %v375 = vadd.f32 %v164, %v374
    %376 = vdwg.mxu0
    %377 = vmatprep.subr.bf16.mxu0 %v265
    %378 = vmatpush1.bf16.msra.mxu0 %v264
    %379 = vmatprep.subr.bf16.mxu0 %v273
    %380 = vmatpush1.bf16.msra.mxu0 %v272
    %381 = vmatprep.subr.bf16.mxu0 %v320
    %382 = vmatpush1.bf16.msra.mxu0 %v317
    %383 = vmatprep.subr.bf16.mxu0 0
    %384 = vmatpush1.bf16.msra.mxu0 0
    %385 = vmatprep.subr.bf16.mxu0 0
    %386 = vmatpush1.bf16.msra.mxu0 0
    %387 = vmatprep.subr.bf16.mxu0 0
    %388 = vmatpush1.bf16.msra.mxu0 0
    %389 = vmatprep.subr.bf16.mxu0 0
    %390 = vmatpush1.bf16.msra.mxu0 0
    %391 = vmatprep.subr.bf16.mxu0 0
    %392 = vmatpush1.bf16.msra.mxu0 0
    %393 = vmatprep.subr.bf16.mxu0 0
    %394 = vmatpush1.bf16.msra.mxu0 0
    %395 = vmatprep.subr.bf16.mxu0 0
    %396 = vmatpush1.bf16.msra.mxu0 0
    %397 = vmatprep.subr.bf16.mxu0 0
    %398 = vmatpush1.bf16.msra.mxu0 0
    %399 = vmatprep.subr.bf16.mxu0 0
    %400 = vmatpush1.bf16.msra.mxu0 0
    %401 = vmatprep.subr.bf16.mxu0 0
    %402 = vmatpush1.bf16.msra.mxu0 0
    %403 = vmatprep.subr.bf16.mxu0 0
    %404 = vmatpush1.bf16.msra.mxu0 0
    %405 = vmatprep.subr.bf16.mxu0 0
    %406 = vmatpush1.bf16.msra.mxu0 0
    %407 = vmatprep.subr.bf16.mxu0 0
    %408 = vmatpush1.bf16.msra.mxu0 0
    %409 = vmatprep.mubr.bf16.mxu0 0
    %410 = vmatmul.mubr.bf16.gmra.mrb[0].mxu0 %v304
    %v411 = vpop.f32.mrb[0].mxu0
    %v412 = vadd.f32 %v168, %v411
    %v413 = vpop.f32.mrb[0].mxu0
    %v414 = vadd.f32 %v172, %v413
    %v415 = vpop.f32.mrb[0].mxu0
    %v416 = vadd.f32 %v168, %v415
    %v417 = vpop.f32.mrb[0].mxu0
    %v418 = vadd.f32 %v172, %v417
    %419 = vdwg.mxu0
    %420 = vmatprep.subr.bf16.mxu0 %v267
    %421 = vmatpush1.bf16.msra.mxu0 %v266
    %422 = vmatprep.subr.bf16.mxu0 %v275
    %423 = vmatpush1.bf16.msra.mxu0 %v274
    %424 = vmatprep.subr.bf16.mxu0 %v326
    %425 = vmatpush1.bf16.msra.mxu0 %v323
    %426 = vmatprep.subr.bf16.mxu0 0
    %427 = vmatpush1.bf16.msra.mxu0 0
    %428 = vmatprep.subr.bf16.mxu0 0
    %429 = vmatpush1.bf16.msra.mxu0 0
    %430 = vmatprep.subr.bf16.mxu0 0
    %431 = vmatpush1.bf16.msra.mxu0 0
    %432 = vmatprep.subr.bf16.mxu0 0
    %433 = vmatpush1.bf16.msra.mxu0 0
    %434 = vmatprep.subr.bf16.mxu0 0
    %435 = vmatpush1.bf16.msra.mxu0 0
    %436 = vmatprep.subr.bf16.mxu0 0
    %437 = vmatpush1.bf16.msra.mxu0 0
    %438 = vmatprep.subr.bf16.mxu0 0
    %439 = vmatpush1.bf16.msra.mxu0 0
    %440 = vmatprep.subr.bf16.mxu0 0
    %441 = vmatpush1.bf16.msra.mxu0 0
    %442 = vmatprep.subr.bf16.mxu0 0
    %443 = vmatpush1.bf16.msra.mxu0 0
    %444 = vmatprep.subr.bf16.mxu0 0
    %445 = vmatpush1.bf16.msra.mxu0 0
    %446 = vmatprep.subr.bf16.mxu0 0
    %447 = vmatpush1.bf16.msra.mxu0 0
    %448 = vmatprep.subr.bf16.mxu0 0
    %449 = vmatpush1.bf16.msra.mxu0 0
    %450 = vmatprep.subr.bf16.mxu0 0
    %451 = vmatpush1.bf16.msra.mxu0 0
    %452 = vmatprep.mubr.bf16.mxu0 0
    %453 = vmatmul.mubr.bf16.gmra.mrb[0].mxu0 %v304
    %v454 = vpop.f32.mrb[0].mxu0
    %v455 = vadd.f32 %v176, %v454
    %v456 = vpop.f32.mrb[0].mxu0
    %v457 = vadd.f32 %v180, %v456
    %v458 = vpop.f32.mrb[0].mxu0
    %v459 = vadd.f32 %v176, %v458
    %v460 = vpop.f32.mrb[0].mxu0
    %v461 = vadd.f32 %v180, %v460
    %462 = vdwg.mxu0
    %463 = vmatprep.subr.bf16.mxu0 %v269
    %464 = vmatpush1.bf16.msra.mxu0 %v268
    %465 = vmatprep.subr.bf16.mxu0 %v277
    %466 = vmatpush1.bf16.msra.mxu0 %v276
    %467 = vmatprep.subr.bf16.mxu0 %v332
    %468 = vmatpush1.bf16.msra.mxu0 %v329
    %469 = vmatprep.subr.bf16.mxu0 0
    %470 = vmatpush1.bf16.msra.mxu0 0
    %471 = vmatprep.subr.bf16.mxu0 0
    %472 = vmatpush1.bf16.msra.mxu0 0
    %473 = vmatprep.subr.bf16.mxu0 0
    %474 = vmatpush1.bf16.msra.mxu0 0
    %475 = vmatprep.subr.bf16.mxu0 0
    %476 = vmatpush1.bf16.msra.mxu0 0
    %477 = vmatprep.subr.bf16.mxu0 0
    %478 = vmatpush1.bf16.msra.mxu0 0
    %479 = vmatprep.subr.bf16.mxu0 0
    %480 = vmatpush1.bf16.msra.mxu0 0
    %481 = vmatprep.subr.bf16.mxu0 0
    %482 = vmatpush1.bf16.msra.mxu0 0
    %483 = vmatprep.subr.bf16.mxu0 0
    %484 = vmatpush1.bf16.msra.mxu0 0
    %485 = vmatprep.subr.bf16.mxu0 0
    %486 = vmatpush1.bf16.msra.mxu0 0
    %487 = vmatprep.subr.bf16.mxu0 0
    %488 = vmatpush1.bf16.msra.mxu0 0
    %489 = vmatprep.subr.bf16.mxu0 0
    %490 = vmatpush1.bf16.msra.mxu0 0
    %491 = vmatprep.subr.bf16.mxu0 0
    %492 = vmatpush1.bf16.msra.mxu0 0
    %493 = vmatprep.subr.bf16.mxu0 0
    %494 = vmatpush1.bf16.msra.mxu0 0
    %495 = vmatprep.mubr.bf16.mxu0 0
    %496 = vmatmul.mubr.bf16.gmra.mrb[0].mxu0 %v304
    %v497 = vpop.f32.mrb[0].mxu0
    %v498 = vadd.f32 %v184, %v497
    %v499 = vpop.f32.mrb[0].mxu0
    %v500 = vadd.f32 %v188, %v499
    %v501 = vpop.f32.mrb[0].mxu0
    %v502 = vadd.f32 %v184, %v501
    %v503 = vpop.f32.mrb[0].mxu0
    %v504 = vadd.f32 %v188, %v503
    %505 = vdwg.mxu0
    %v506 = vmax.f32 %v369, 0.0
    %v507 = vmax.f32 %v371, 0.0
    %v508 = vmax.f32 %v412, 0.0
    %v509 = vmax.f32 %v414, 0.0
    %v510 = vmax.f32 %v455, 0.0
    %v511 = vmax.f32 %v457, 0.0
    %v512 = vmax.f32 %v498, 0.0
    %v513 = vmax.f32 %v500, 0.0
    %v514 = vmax.f32 %v373, 0.0
    %v515 = vmax.f32 %v375, 0.0
    %v516 = vmax.f32 %v416, 0.0
    %v517 = vmax.f32 %v418, 0.0
    %v518 = vmax.f32 %v459, 0.0
    %v519 = vmax.f32 %v461, 0.0
    %v520 = vmax.f32 %v502, 0.0
    %v521 = vmax.f32 %v504, 0.0
    %v522 = vpack.c.bf16 %v514, %v506
    %v523 = vpack.c.bf16 %v515, %v507
    %v524 = vpack.c.bf16 %v516, %v508
    %v525 = vpack.c.bf16 %v517, %v509
    %v526 = vpack.c.bf16 %v518, %v510
    %v527 = vpack.c.bf16 %v519, %v511
    %v528 = vpack.c.bf16 %v520, %v512
    %v529 = vpack.c.bf16 %v521, %v513
    %v530 = vld [vmem:[#allocation8] sm:$0xff]
    %v531 = vld [vmem:[#allocation8 + $0x8] sm:$0xff]
    %v532 = vld [vmem:[#allocation8 + $0x10] sm:$0xff]
    %v533 = vld [vmem:[#allocation8 + $0x18] sm:$0xff]
    %v534 = vld [vmem:[#allocation8 + $0x20] sm:$0xff]
    %v535 = vld [vmem:[#allocation8 + $0x28] sm:$0xff]
    %v536 = vld [vmem:[#allocation8 + $0x30] sm:$0xff]
    %v537 = vld [vmem:[#allocation8 + $0x38] sm:$0xff]
    %v538 = vld [vmem:[#allocation8 + $0x40] sm:$0xff]
    %v539 = vld [vmem:[#allocation8 + $0x48] sm:$0xff]
    %v540 = vld [vmem:[#allocation8 + $0x50] sm:$0xff]
    %v541 = vld [vmem:[#allocation8 + $0x58] sm:$0xff]
    %v542 = vld [vmem:[#allocation8 + $0x60] sm:$0xff]
    %v543 = vld [vmem:[#allocation8 + $0x68] sm:$0xff]
    %v544 = vld [vmem:[#allocation8 + $0x70] sm:$0xff]
    %v545 = vld [vmem:[#allocation8 + $0x78] sm:$0xff]
    %v546 = vld [vmem:[#allocation8 + $0x80] sm:$0xff]
    %v547 = vld [vmem:[#allocation8 + $0x88] sm:$0xff]
    %v548 = vld [vmem:[#allocation8 + $0x90] sm:$0xff]
    %v549 = vld [vmem:[#allocation8 + $0x98] sm:$0xff]
    %v550 = vld [vmem:[#allocation8 + $0xa0] sm:$0xff]
    %v551 = vld [vmem:[#allocation8 + $0xa8] sm:$0xff]
    %v552 = vld [vmem:[#allocation8 + $0xb0] sm:$0xff]
    %v553 = vld [vmem:[#allocation8 + $0xb8] sm:$0xff]
    %v554 = vld [vmem:[#allocation8 + $0xc0] sm:$0xff]
    %v555 = vld [vmem:[#allocation8 + $0xc8] sm:$0xff]
    %v556 = vld [vmem:[#allocation8 + $0xd0] sm:$0xff]
    %v557 = vld [vmem:[#allocation8 + $0xd8] sm:$0xff]
    %v558 = vld [vmem:[#allocation8 + $0xe0] sm:$0xff]
    %v559 = vld [vmem:[#allocation8 + $0xe8] sm:$0xff]
    %v560 = vld [vmem:[#allocation8 + $0xf0] sm:$0xff]
    %v561 = vld [vmem:[#allocation8 + $0xf8] sm:$0xff]
    %v562 = vld [vmem:[#allocation8 + $0x100] sm:$0xff]
    %v563 = vld [vmem:[#allocation8 + $0x108] sm:$0xff]
    %v564 = vld [vmem:[#allocation8 + $0x110] sm:$0xff]
    %v565 = vld [vmem:[#allocation8 + $0x118] sm:$0xff]
    %v566 = vld [vmem:[#allocation8 + $0x120] sm:$0xff]
    %v567 = vld [vmem:[#allocation8 + $0x128] sm:$0xff]
    %v568 = vld [vmem:[#allocation8 + $0x130] sm:$0xff]
    %v569 = vld [vmem:[#allocation8 + $0x138] sm:$0xff]
    %v570 = vld [vmem:[#allocation8 + $0x140] sm:$0xff]
    %v571 = vld [vmem:[#allocation8 + $0x148] sm:$0xff]
    %v572 = vld [vmem:[#allocation8 + $0x150] sm:$0xff]
    %v573 = vld [vmem:[#allocation8 + $0x158] sm:$0xff]
    %v574 = vld [vmem:[#allocation8 + $0x160] sm:$0xff]
    %v575 = vld [vmem:[#allocation8 + $0x168] sm:$0xff]
    %v576 = vld [vmem:[#allocation8 + $0x170] sm:$0xff]
    %v577 = vld [vmem:[#allocation8 + $0x178] sm:$0xff]
    %v578 = vld [vmem:[#allocation8 + $0x180] sm:$0xff]
    %v579 = vld [vmem:[#allocation8 + $0x188] sm:$0xff]
    %v580 = vld [vmem:[#allocation8 + $0x190] sm:$0xff]
    %v581 = vld [vmem:[#allocation8 + $0x198] sm:$0xff]
    %v582 = vld [vmem:[#allocation8 + $0x1a0] sm:$0xff]
    %v583 = vld [vmem:[#allocation8 + $0x1a8] sm:$0xff]
    %v584 = vld [vmem:[#allocation8 + $0x1b0] sm:$0xff]
    %v585 = vld [vmem:[#allocation8 + $0x1b8] sm:$0xff]
    %v586 = vld [vmem:[#allocation8 + $0x1c0] sm:$0xff]
    %v587 = vld [vmem:[#allocation8 + $0x1c8] sm:$0xff]
    %v588 = vld [vmem:[#allocation8 + $0x1d0] sm:$0xff]
    %v589 = vld [vmem:[#allocation8 + $0x1d8] sm:$0xff]
    %v590 = vld [vmem:[#allocation8 + $0x1e0] sm:$0xff]
    %v591 = vld [vmem:[#allocation8 + $0x1e8] sm:$0xff]
    %v592 = vld [vmem:[#allocation8 + $0x1f0] sm:$0xff]
    %v593 = vld [vmem:[#allocation8 + $0x1f8] sm:$0xff]
    %v594 = vld [vmem:[#allocation8 + $0x200] sm:$0xff]
    %v595 = vld [vmem:[#allocation8 + $0x208] sm:$0xff]
    %v596 = vld [vmem:[#allocation8 + $0x210] sm:$0xff]
    %v597 = vld [vmem:[#allocation8 + $0x218] sm:$0xff]
    %v598 = vld [vmem:[#allocation8 + $0x220] sm:$0xff]
    %v599 = vld [vmem:[#allocation8 + $0x228] sm:$0xff]
    %v600 = vld [vmem:[#allocation8 + $0x230] sm:$0xff]
    %v601 = vld [vmem:[#allocation8 + $0x238] sm:$0xff]
    %v602 = vld [vmem:[#allocation8 + $0x240] sm:$0xff]
    %v603 = vld [vmem:[#allocation8 + $0x248] sm:$0xff]
    %v604 = vld [vmem:[#allocation8 + $0x250] sm:$0xff]
    %v605 = vld [vmem:[#allocation8 + $0x258] sm:$0xff]
    %v606 = vld [vmem:[#allocation8 + $0x260] sm:$0xff]
    %v607 = vld [vmem:[#allocation8 + $0x268] sm:$0xff]
    %v608 = vld [vmem:[#allocation8 + $0x270] sm:$0xff]
    %v609 = vld [vmem:[#allocation8 + $0x278] sm:$0xff]
    %v610 = vld [vmem:[#allocation8 + $0x280] sm:$0xff]
    %v611 = vld [vmem:[#allocation8 + $0x288] sm:$0xff]
    %v612 = vld [vmem:[#allocation8 + $0x290] sm:$0xff]
    %v613 = vld [vmem:[#allocation8 + $0x298] sm:$0xff]
    %v614 = vld [vmem:[#allocation8 + $0x2a0] sm:$0xff]
    %v615 = vld [vmem:[#allocation8 + $0x2a8] sm:$0xff]
    %v616 = vld [vmem:[#allocation8 + $0x2b0] sm:$0xff]
    %v617 = vld [vmem:[#allocation8 + $0x2b8] sm:$0xff]
    %v618 = vld [vmem:[#allocation8 + $0x2c0] sm:$0xff]
    %v619 = vld [vmem:[#allocation8 + $0x2c8] sm:$0xff]
    %v620 = vld [vmem:[#allocation8 + $0x2d0] sm:$0xff]
    %v621 = vld [vmem:[#allocation8 + $0x2d8] sm:$0xff]
    %v622 = vld [vmem:[#allocation8 + $0x2e0] sm:$0xff]
    %v623 = vld [vmem:[#allocation8 + $0x2e8] sm:$0xff]
    %v624 = vld [vmem:[#allocation8 + $0x2f0] sm:$0xff]
    %v625 = vld [vmem:[#allocation8 + $0x2f8] sm:$0xff]
    %v626 = vld [vmem:[#allocation8 + $0x300] sm:$0xff]
    %v627 = vld [vmem:[#allocation8 + $0x308] sm:$0xff]
    %v628 = vld [vmem:[#allocation8 + $0x310] sm:$0xff]
    %v629 = vld [vmem:[#allocation8 + $0x318] sm:$0xff]
    %v630 = vld [vmem:[#allocation8 + $0x320] sm:$0xff]
    %v631 = vld [vmem:[#allocation8 + $0x328] sm:$0xff]
    %v632 = vld [vmem:[#allocation8 + $0x330] sm:$0xff]
    %v633 = vld [vmem:[#allocation8 + $0x338] sm:$0xff]
    %v634 = vld [vmem:[#allocation8 + $0x340] sm:$0xff]
    %v635 = vld [vmem:[#allocation8 + $0x348] sm:$0xff]
    %v636 = vld [vmem:[#allocation8 + $0x350] sm:$0xff]
    %v637 = vld [vmem:[#allocation8 + $0x358] sm:$0xff]
    %v638 = vld [vmem:[#allocation8 + $0x360] sm:$0xff]
    %v639 = vld [vmem:[#allocation8 + $0x368] sm:$0xff]
    %v640 = vld [vmem:[#allocation8 + $0x370] sm:$0xff]
    %v641 = vld [vmem:[#allocation8 + $0x378] sm:$0xff]
    %v642 = vld [vmem:[#allocation8 + $0x380] sm:$0xff]
    %v643 = vld [vmem:[#allocation8 + $0x388] sm:$0xff]
    %v644 = vld [vmem:[#allocation8 + $0x390] sm:$0xff]
    %v645 = vld [vmem:[#allocation8 + $0x398] sm:$0xff]
    %v646 = vld [vmem:[#allocation8 + $0x3a0] sm:$0xff]
    %v647 = vld [vmem:[#allocation8 + $0x3a8] sm:$0xff]
    %v648 = vld [vmem:[#allocation8 + $0x3b0] sm:$0xff]
    %v649 = vld [vmem:[#allocation8 + $0x3b8] sm:$0xff]
    %v650 = vld [vmem:[#allocation8 + $0x3c0] sm:$0xff]
    %v651 = vld [vmem:[#allocation8 + $0x3c8] sm:$0xff]
    %v652 = vld [vmem:[#allocation8 + $0x3d0] sm:$0xff]
    %v653 = vld [vmem:[#allocation8 + $0x3d8] sm:$0xff]
    %v654 = vld [vmem:[#allocation8 + $0x3e0] sm:$0xff]
    %v655 = vld [vmem:[#allocation8 + $0x3e8] sm:$0xff]
    %v656 = vld [vmem:[#allocation8 + $0x3f0] sm:$0xff]
    %v657 = vld [vmem:[#allocation8 + $0x3f8] sm:$0xff]
    %v658 = vld [vmem:[#allocation8 + $0x400] sm:$0xff]
    %v659 = vld [vmem:[#allocation8 + $0x408] sm:$0xff]
    %v660 = vld [vmem:[#allocation8 + $0x410] sm:$0xff]
    %v661 = vld [vmem:[#allocation8 + $0x418] sm:$0xff]
    %v662 = vld [vmem:[#allocation8 + $0x420] sm:$0xff]
    %v663 = vld [vmem:[#allocation8 + $0x428] sm:$0xff]
    %v664 = vld [vmem:[#allocation8 + $0x430] sm:$0xff]
    %v665 = vld [vmem:[#allocation8 + $0x438] sm:$0xff]
    %v666 = vld [vmem:[#allocation8 + $0x440] sm:$0xff]
    %v667 = vld [vmem:[#allocation8 + $0x448] sm:$0xff]
    %v668 = vld [vmem:[#allocation8 + $0x450] sm:$0xff]
    %v669 = vld [vmem:[#allocation8 + $0x458] sm:$0xff]
    %v670 = vld [vmem:[#allocation8 + $0x460] sm:$0xff]
    %v671 = vld [vmem:[#allocation8 + $0x468] sm:$0xff]
    %v672 = vld [vmem:[#allocation8 + $0x470] sm:$0xff]
    %v673 = vld [vmem:[#allocation8 + $0x478] sm:$0xff]
    %v674 = vld [vmem:[#allocation8 + $0x480] sm:$0xff]
    %v675 = vld [vmem:[#allocation8 + $0x488] sm:$0xff]
    %v676 = vld [vmem:[#allocation8 + $0x490] sm:$0xff]
    %v677 = vld [vmem:[#allocation8 + $0x498] sm:$0xff]
    %v678 = vld [vmem:[#allocation8 + $0x4a0] sm:$0xff]
    %v679 = vld [vmem:[#allocation8 + $0x4a8] sm:$0xff]
    %v680 = vld [vmem:[#allocation8 + $0x4b0] sm:$0xff]
    %v681 = vld [vmem:[#allocation8 + $0x4b8] sm:$0xff]
    %v682 = vld [vmem:[#allocation8 + $0x4c0] sm:$0xff]
    %v683 = vld [vmem:[#allocation8 + $0x4c8] sm:$0xff]
    %v684 = vld [vmem:[#allocation8 + $0x4d0] sm:$0xff]
    %v685 = vld [vmem:[#allocation8 + $0x4d8] sm:$0xff]
    %v686 = vld [vmem:[#allocation8 + $0x4e0] sm:$0xff]
    %v687 = vld [vmem:[#allocation8 + $0x4e8] sm:$0xff]
    %v688 = vld [vmem:[#allocation8 + $0x4f0] sm:$0xff]
    %v689 = vld [vmem:[#allocation8 + $0x4f8] sm:$0xff]
    %v690 = vld [vmem:[#allocation8 + $0x500] sm:$0xff]
    %v691 = vld [vmem:[#allocation8 + $0x508] sm:$0xff]
    %v692 = vld [vmem:[#allocation8 + $0x510] sm:$0xff]
    %v693 = vld [vmem:[#allocation8 + $0x518] sm:$0xff]
    %v694 = vld [vmem:[#allocation8 + $0x520] sm:$0xff]
    %v695 = vld [vmem:[#allocation8 + $0x528] sm:$0xff]
    %v696 = vld [vmem:[#allocation8 + $0x530] sm:$0xff]
    %v697 = vld [vmem:[#allocation8 + $0x538] sm:$0xff]
    %v698 = vld [vmem:[#allocation8 + $0x540] sm:$0xff]
    %v699 = vld [vmem:[#allocation8 + $0x548] sm:$0xff]
    %v700 = vld [vmem:[#allocation8 + $0x550] sm:$0xff]
    %v701 = vld [vmem:[#allocation8 + $0x558] sm:$0xff]
    %v702 = vld [vmem:[#allocation8 + $0x560] sm:$0xff]
    %v703 = vld [vmem:[#allocation8 + $0x568] sm:$0xff]
    %v704 = vld [vmem:[#allocation8 + $0x570] sm:$0xff]
    %v705 = vld [vmem:[#allocation8 + $0x578] sm:$0xff]
    %v706 = vld [vmem:[#allocation8 + $0x580] sm:$0xff]
    %v707 = vld [vmem:[#allocation8 + $0x588] sm:$0xff]
    %v708 = vld [vmem:[#allocation8 + $0x590] sm:$0xff]
    %v709 = vld [vmem:[#allocation8 + $0x598] sm:$0xff]
    %v710 = vld [vmem:[#allocation8 + $0x5a0] sm:$0xff]
    %v711 = vld [vmem:[#allocation8 + $0x5a8] sm:$0xff]
    %v712 = vld [vmem:[#allocation8 + $0x5b0] sm:$0xff]
    %v713 = vld [vmem:[#allocation8 + $0x5b8] sm:$0xff]
    %v714 = vld [vmem:[#allocation8 + $0x5c0] sm:$0xff]
    %v715 = vld [vmem:[#allocation8 + $0x5c8] sm:$0xff]
    %v716 = vld [vmem:[#allocation8 + $0x5d0] sm:$0xff]
    %v717 = vld [vmem:[#allocation8 + $0x5d8] sm:$0xff]
    %v718 = vld [vmem:[#allocation8 + $0x5e0] sm:$0xff]
    %v719 = vld [vmem:[#allocation8 + $0x5e8] sm:$0xff]
    %v720 = vld [vmem:[#allocation8 + $0x5f0] sm:$0xff]
    %v721 = vld [vmem:[#allocation8 + $0x5f8] sm:$0xff]
    %v722 = vld [vmem:[#allocation8 + $0x600] sm:$0xff]
    %v723 = vld [vmem:[#allocation8 + $0x608] sm:$0xff]
    %v724 = vld [vmem:[#allocation8 + $0x610] sm:$0xff]
    %v725 = vld [vmem:[#allocation8 + $0x618] sm:$0xff]
    %v726 = vld [vmem:[#allocation8 + $0x620] sm:$0xff]
    %v727 = vld [vmem:[#allocation8 + $0x628] sm:$0xff]
    %v728 = vld [vmem:[#allocation8 + $0x630] sm:$0xff]
    %v729 = vld [vmem:[#allocation8 + $0x638] sm:$0xff]
    %v730 = vld [vmem:[#allocation8 + $0x640] sm:$0xff]
    %v731 = vld [vmem:[#allocation8 + $0x648] sm:$0xff]
    %v732 = vld [vmem:[#allocation8 + $0x650] sm:$0xff]
    %v733 = vld [vmem:[#allocation8 + $0x658] sm:$0xff]
    %v734 = vld [vmem:[#allocation8 + $0x660] sm:$0xff]
    %v735 = vld [vmem:[#allocation8 + $0x668] sm:$0xff]
    %v736 = vld [vmem:[#allocation8 + $0x670] sm:$0xff]
    %v737 = vld [vmem:[#allocation8 + $0x678] sm:$0xff]
    %v738 = vld [vmem:[#allocation8 + $0x680] sm:$0xff]
    %v739 = vld [vmem:[#allocation8 + $0x688] sm:$0xff]
    %v740 = vld [vmem:[#allocation8 + $0x690] sm:$0xff]
    %v741 = vld [vmem:[#allocation8 + $0x698] sm:$0xff]
    %v742 = vld [vmem:[#allocation8 + $0x6a0] sm:$0xff]
    %v743 = vld [vmem:[#allocation8 + $0x6a8] sm:$0xff]
    %v744 = vld [vmem:[#allocation8 + $0x6b0] sm:$0xff]
    %v745 = vld [vmem:[#allocation8 + $0x6b8] sm:$0xff]
    %v746 = vld [vmem:[#allocation8 + $0x6c0] sm:$0xff]
    %v747 = vld [vmem:[#allocation8 + $0x6c8] sm:$0xff]
    %v748 = vld [vmem:[#allocation8 + $0x6d0] sm:$0xff]
    %v749 = vld [vmem:[#allocation8 + $0x6d8] sm:$0xff]
    %v750 = vld [vmem:[#allocation8 + $0x6e0] sm:$0xff]
    %v751 = vld [vmem:[#allocation8 + $0x6e8] sm:$0xff]
    %v752 = vld [vmem:[#allocation8 + $0x6f0] sm:$0xff]
    %v753 = vld [vmem:[#allocation8 + $0x6f8] sm:$0xff]
    %v754 = vld [vmem:[#allocation8 + $0x700] sm:$0xff]
    %v755 = vld [vmem:[#allocation8 + $0x708] sm:$0xff]
    %v756 = vld [vmem:[#allocation8 + $0x710] sm:$0xff]
    %v757 = vld [vmem:[#allocation8 + $0x718] sm:$0xff]
    %v758 = vld [vmem:[#allocation8 + $0x720] sm:$0xff]
    %v759 = vld [vmem:[#allocation8 + $0x728] sm:$0xff]
    %v760 = vld [vmem:[#allocation8 + $0x730] sm:$0xff]
    %v761 = vld [vmem:[#allocation8 + $0x738] sm:$0xff]
    %v762 = vld [vmem:[#allocation8 + $0x740] sm:$0xff]
    %v763 = vld [vmem:[#allocation8 + $0x748] sm:$0xff]
    %v764 = vld [vmem:[#allocation8 + $0x750] sm:$0xff]
    %v765 = vld [vmem:[#allocation8 + $0x758] sm:$0xff]
    %v766 = vld [vmem:[#allocation8 + $0x760] sm:$0xff]
    %v767 = vld [vmem:[#allocation8 + $0x768] sm:$0xff]
    %v768 = vld [vmem:[#allocation8 + $0x770] sm:$0xff]
    %v769 = vld [vmem:[#allocation8 + $0x778] sm:$0xff]
    %v770 = vld [vmem:[#allocation8 + $0x780] sm:$0xff]
    %v771 = vld [vmem:[#allocation8 + $0x788] sm:$0xff]
    %v772 = vld [vmem:[#allocation8 + $0x790] sm:$0xff]
    %v773 = vld [vmem:[#allocation8 + $0x798] sm:$0xff]
    %v774 = vld [vmem:[#allocation8 + $0x7a0] sm:$0xff]
    %v775 = vld [vmem:[#allocation8 + $0x7a8] sm:$0xff]
    %v776 = vld [vmem:[#allocation8 + $0x7b0] sm:$0xff]
    %v777 = vld [vmem:[#allocation8 + $0x7b8] sm:$0xff]
    %v778 = vld [vmem:[#allocation8 + $0x7c0] sm:$0xff]
    %v779 = vld [vmem:[#allocation8 + $0x7c8] sm:$0xff]
    %v780 = vld [vmem:[#allocation8 + $0x7d0] sm:$0xff]
    %v781 = vld [vmem:[#allocation8 + $0x7d8] sm:$0xff]
    %v782 = vld [vmem:[#allocation8 + $0x7e0] sm:$0xff]
    %v783 = vld [vmem:[#allocation8 + $0x7e8] sm:$0xff]
    %v784 = vld [vmem:[#allocation8 + $0x7f0] sm:$0xff]
    %v785 = vld [vmem:[#allocation8 + $0x7f8] sm:$0xff]
    %v786 = vld [vmem:[%s4] sm:$0xf]
    %v788 = vlaneseq
    %v789 = vshrl.u32 %v788, 7
    %v790 = vsub.s32 0, %v789
    %v791 = vrot.slane %v786, %v790
    %v792 = vlaneseq
    %v793 = vshrl.u32 %v792, 7
    %v794 = vsub.s32 1, %v793
    %v795 = vrot.slane %v786, %v794
    %v796 = vlaneseq
    %v797 = vshrl.u32 %v796, 7
    %v798 = vsub.s32 2, %v797
    %v799 = vrot.slane %v786, %v798
    %v800 = vlaneseq
    %v801 = vshrl.u32 %v800, 7
    %v802 = vsub.s32 3, %v801
    %v803 = vrot.slane %v786, %v802
    %v1064 = vunpack.c.l.b16 %v530
    %v1065 = vunpack.c.h.b16 %v530
    %v1066 = vunpack.c.l.b16 %v531
    %v1067 = vunpack.c.h.b16 %v531
    %v1068 = vunpack.c.l.b16 %v532
    %v1069 = vunpack.c.h.b16 %v532
    %v1070 = vunpack.c.l.b16 %v533
    %v1071 = vunpack.c.h.b16 %v533
    %v1072 = vunpack.c.l.b16 %v534
    %v1073 = vunpack.c.h.b16 %v534
    %v1074 = vunpack.c.l.b16 %v535
    %v1075 = vunpack.c.h.b16 %v535
    %v1076 = vunpack.c.l.b16 %v536
    %v1077 = vunpack.c.h.b16 %v536
    %v1078 = vunpack.c.l.b16 %v537
    %v1079 = vunpack.c.h.b16 %v537
    %v1080 = vunpack.c.l.b16 %v538
    %v1081 = vunpack.c.h.b16 %v538
    %v1082 = vunpack.c.l.b16 %v539
    %v1083 = vunpack.c.h.b16 %v539
    %v1084 = vunpack.c.l.b16 %v540
    %v1085 = vunpack.c.h.b16 %v540
    %v1086 = vunpack.c.l.b16 %v541
    %v1087 = vunpack.c.h.b16 %v541
    %v1088 = vunpack.c.l.b16 %v542
    %v1089 = vunpack.c.h.b16 %v542
    %v1090 = vunpack.c.l.b16 %v543
    %v1091 = vunpack.c.h.b16 %v543
    %v1092 = vunpack.c.l.b16 %v544
    %v1093 = vunpack.c.h.b16 %v544
    %v1094 = vunpack.c.l.b16 %v545
    %v1095 = vunpack.c.h.b16 %v545
    %v1096 = vunpack.c.l.b16 %v546
    %v1097 = vunpack.c.h.b16 %v546
    %v1098 = vunpack.c.l.b16 %v547
    %v1099 = vunpack.c.h.b16 %v547
    %v1100 = vunpack.c.l.b16 %v548
    %v1101 = vunpack.c.h.b16 %v548
    %v1102 = vunpack.c.l.b16 %v549
    %v1103 = vunpack.c.h.b16 %v549
    %v1104 = vunpack.c.l.b16 %v550
    %v1105 = vunpack.c.h.b16 %v550
    %v1106 = vunpack.c.l.b16 %v551
    %v1107 = vunpack.c.h.b16 %v551
    %v1108 = vunpack.c.l.b16 %v552
    %v1109 = vunpack.c.h.b16 %v552
    %v1110 = vunpack.c.l.b16 %v553
    %v1111 = vunpack.c.h.b16 %v553
    %v1112 = vunpack.c.l.b16 %v554
    %v1113 = vunpack.c.h.b16 %v554
    %v1114 = vunpack.c.l.b16 %v555
    %v1115 = vunpack.c.h.b16 %v555
    %v1116 = vunpack.c.l.b16 %v556
    %v1117 = vunpack.c.h.b16 %v556
    %v1118 = vunpack.c.l.b16 %v557
    %v1119 = vunpack.c.h.b16 %v557
    %v1120 = vunpack.c.l.b16 %v558
    %v1121 = vunpack.c.h.b16 %v558
    %v1122 = vunpack.c.l.b16 %v559
    %v1123 = vunpack.c.h.b16 %v559
    %v1124 = vunpack.c.l.b16 %v560
    %v1125 = vunpack.c.h.b16 %v560
    %v1126 = vunpack.c.l.b16 %v561
    %v1127 = vunpack.c.h.b16 %v561
    %v1128 = vunpack.c.l.b16 %v562
    %v1129 = vunpack.c.h.b16 %v562
    %v1130 = vunpack.c.l.b16 %v563
    %v1131 = vunpack.c.h.b16 %v563
    %v1132 = vunpack.c.l.b16 %v564
    %v1133 = vunpack.c.h.b16 %v564
    %v1134 = vunpack.c.l.b16 %v565
    %v1135 = vunpack.c.h.b16 %v565
    %v1136 = vunpack.c.l.b16 %v566
    %v1137 = vunpack.c.h.b16 %v566
    %v1138 = vunpack.c.l.b16 %v567
    %v1139 = vunpack.c.h.b16 %v567
    %v1140 = vunpack.c.l.b16 %v568
    %v1141 = vunpack.c.h.b16 %v568
    %v1142 = vunpack.c.l.b16 %v569
    %v1143 = vunpack.c.h.b16 %v569
    %v1144 = vunpack.c.l.b16 %v570
    %v1145 = vunpack.c.h.b16 %v570
    %v1146 = vunpack.c.l.b16 %v571
    %v1147 = vunpack.c.h.b16 %v571
    %v1148 = vunpack.c.l.b16 %v572
    %v1149 = vunpack.c.h.b16 %v572
    %v1150 = vunpack.c.l.b16 %v573
    %v1151 = vunpack.c.h.b16 %v573
    %v1152 = vunpack.c.l.b16 %v574
    %v1153 = vunpack.c.h.b16 %v574
    %v1154 = vunpack.c.l.b16 %v575
    %v1155 = vunpack.c.h.b16 %v575
    %v1156 = vunpack.c.l.b16 %v576
    %v1157 = vunpack.c.h.b16 %v576
    %v1158 = vunpack.c.l.b16 %v577
    %v1159 = vunpack.c.h.b16 %v577
    %v1160 = vunpack.c.l.b16 %v578
    %v1161 = vunpack.c.h.b16 %v578
    %v1162 = vunpack.c.l.b16 %v579
    %v1163 = vunpack.c.h.b16 %v579
    %v1164 = vunpack.c.l.b16 %v580
    %v1165 = vunpack.c.h.b16 %v580
    %v1166 = vunpack.c.l.b16 %v581
    %v1167 = vunpack.c.h.b16 %v581
    %v1168 = vunpack.c.l.b16 %v582
    %v1169 = vunpack.c.h.b16 %v582
    %v1170 = vunpack.c.l.b16 %v583
    %v1171 = vunpack.c.h.b16 %v583
    %v1172 = vunpack.c.l.b16 %v584
    %v1173 = vunpack.c.h.b16 %v584
    %v1174 = vunpack.c.l.b16 %v585
    %v1175 = vunpack.c.h.b16 %v585
    %v1176 = vunpack.c.l.b16 %v586
    %v1177 = vunpack.c.h.b16 %v586
    %v1178 = vunpack.c.l.b16 %v587
    %v1179 = vunpack.c.h.b16 %v587
    %v1180 = vunpack.c.l.b16 %v588
    %v1181 = vunpack.c.h.b16 %v588
    %v1182 = vunpack.c.l.b16 %v589
    %v1183 = vunpack.c.h.b16 %v589
    %v1184 = vunpack.c.l.b16 %v590
    %v1185 = vunpack.c.h.b16 %v590
    %v1186 = vunpack.c.l.b16 %v591
    %v1187 = vunpack.c.h.b16 %v591
    %v1188 = vunpack.c.l.b16 %v592
    %v1189 = vunpack.c.h.b16 %v592
    %v1190 = vunpack.c.l.b16 %v593
    %v1191 = vunpack.c.h.b16 %v593
    %v1192 = vunpack.c.l.b16 %v594
    %v1193 = vunpack.c.h.b16 %v594
    %v1194 = vunpack.c.l.b16 %v595
    %v1195 = vunpack.c.h.b16 %v595
    %v1196 = vunpack.c.l.b16 %v596
    %v1197 = vunpack.c.h.b16 %v596
    %v1198 = vunpack.c.l.b16 %v597
    %v1199 = vunpack.c.h.b16 %v597
    %v1200 = vunpack.c.l.b16 %v598
    %v1201 = vunpack.c.h.b16 %v598
    %v1202 = vunpack.c.l.b16 %v599
    %v1203 = vunpack.c.h.b16 %v599
    %v1204 = vunpack.c.l.b16 %v600
    %v1205 = vunpack.c.h.b16 %v600
    %v1206 = vunpack.c.l.b16 %v601
    %v1207 = vunpack.c.h.b16 %v601
    %v1208 = vunpack.c.l.b16 %v602
    %v1209 = vunpack.c.h.b16 %v602
    %v1210 = vunpack.c.l.b16 %v603
    %v1211 = vunpack.c.h.b16 %v603
    %v1212 = vunpack.c.l.b16 %v604
    %v1213 = vunpack.c.h.b16 %v604
    %v1214 = vunpack.c.l.b16 %v605
    %v1215 = vunpack.c.h.b16 %v605
    %v1216 = vunpack.c.l.b16 %v606
    %v1217 = vunpack.c.h.b16 %v606
    %v1218 = vunpack.c.l.b16 %v607
    %v1219 = vunpack.c.h.b16 %v607
    %v1220 = vunpack.c.l.b16 %v608
    %v1221 = vunpack.c.h.b16 %v608
    %v1222 = vunpack.c.l.b16 %v609
    %v1223 = vunpack.c.h.b16 %v609
    %v1224 = vunpack.c.l.b16 %v610
    %v1225 = vunpack.c.h.b16 %v610
    %v1226 = vunpack.c.l.b16 %v611
    %v1227 = vunpack.c.h.b16 %v611
    %v1228 = vunpack.c.l.b16 %v612
    %v1229 = vunpack.c.h.b16 %v612
    %v1230 = vunpack.c.l.b16 %v613
    %v1231 = vunpack.c.h.b16 %v613
    %v1232 = vunpack.c.l.b16 %v614
    %v1233 = vunpack.c.h.b16 %v614
    %v1234 = vunpack.c.l.b16 %v615
    %v1235 = vunpack.c.h.b16 %v615
    %v1236 = vunpack.c.l.b16 %v616
    %v1237 = vunpack.c.h.b16 %v616
    %v1238 = vunpack.c.l.b16 %v617
    %v1239 = vunpack.c.h.b16 %v617
    %v1240 = vunpack.c.l.b16 %v618
    %v1241 = vunpack.c.h.b16 %v618
    %v1242 = vunpack.c.l.b16 %v619
    %v1243 = vunpack.c.h.b16 %v619
    %v1244 = vunpack.c.l.b16 %v620
    %v1245 = vunpack.c.h.b16 %v620
    %v1246 = vunpack.c.l.b16 %v621
    %v1247 = vunpack.c.h.b16 %v621
    %v1248 = vunpack.c.l.b16 %v622
    %v1249 = vunpack.c.h.b16 %v622
    %v1250 = vunpack.c.l.b16 %v623
    %v1251 = vunpack.c.h.b16 %v623
    %v1252 = vunpack.c.l.b16 %v624
    %v1253 = vunpack.c.h.b16 %v624
    %v1254 = vunpack.c.l.b16 %v625
    %v1255 = vunpack.c.h.b16 %v625
    %v1256 = vunpack.c.l.b16 %v626
    %v1257 = vunpack.c.h.b16 %v626
    %v1258 = vunpack.c.l.b16 %v627
    %v1259 = vunpack.c.h.b16 %v627
    %v1260 = vunpack.c.l.b16 %v628
    %v1261 = vunpack.c.h.b16 %v628
    %v1262 = vunpack.c.l.b16 %v629
    %v1263 = vunpack.c.h.b16 %v629
    %v1264 = vunpack.c.l.b16 %v630
    %v1265 = vunpack.c.h.b16 %v630
    %v1266 = vunpack.c.l.b16 %v631
    %v1267 = vunpack.c.h.b16 %v631
    %v1268 = vunpack.c.l.b16 %v632
    %v1269 = vunpack.c.h.b16 %v632
    %v1270 = vunpack.c.l.b16 %v633
    %v1271 = vunpack.c.h.b16 %v633
    %v1272 = vunpack.c.l.b16 %v634
    %v1273 = vunpack.c.h.b16 %v634
    %v1274 = vunpack.c.l.b16 %v635
    %v1275 = vunpack.c.h.b16 %v635
    %v1276 = vunpack.c.l.b16 %v636
    %v1277 = vunpack.c.h.b16 %v636
    %v1278 = vunpack.c.l.b16 %v637
    %v1279 = vunpack.c.h.b16 %v637
    %v1280 = vunpack.c.l.b16 %v638
    %v1281 = vunpack.c.h.b16 %v638
    %v1282 = vunpack.c.l.b16 %v639
    %v1283 = vunpack.c.h.b16 %v639
    %v1284 = vunpack.c.l.b16 %v640
    %v1285 = vunpack.c.h.b16 %v640
    %v1286 = vunpack.c.l.b16 %v641
    %v1287 = vunpack.c.h.b16 %v641
    %v1288 = vunpack.c.l.b16 %v642
    %v1289 = vunpack.c.h.b16 %v642
    %v1290 = vunpack.c.l.b16 %v643
    %v1291 = vunpack.c.h.b16 %v643
    %v1292 = vunpack.c.l.b16 %v644
    %v1293 = vunpack.c.h.b16 %v644
    %v1294 = vunpack.c.l.b16 %v645
    %v1295 = vunpack.c.h.b16 %v645
    %v1296 = vunpack.c.l.b16 %v646
    %v1297 = vunpack.c.h.b16 %v646
    %v1298 = vunpack.c.l.b16 %v647
    %v1299 = vunpack.c.h.b16 %v647
    %v1300 = vunpack.c.l.b16 %v648
    %v1301 = vunpack.c.h.b16 %v648
    %v1302 = vunpack.c.l.b16 %v649
    %v1303 = vunpack.c.h.b16 %v649
    %v1304 = vunpack.c.l.b16 %v650
    %v1305 = vunpack.c.h.b16 %v650
    %v1306 = vunpack.c.l.b16 %v651
    %v1307 = vunpack.c.h.b16 %v651
    %v1308 = vunpack.c.l.b16 %v652
    %v1309 = vunpack.c.h.b16 %v652
    %v1310 = vunpack.c.l.b16 %v653
    %v1311 = vunpack.c.h.b16 %v653
    %v1312 = vunpack.c.l.b16 %v654
    %v1313 = vunpack.c.h.b16 %v654
    %v1314 = vunpack.c.l.b16 %v655
    %v1315 = vunpack.c.h.b16 %v655
    %v1316 = vunpack.c.l.b16 %v656
    %v1317 = vunpack.c.h.b16 %v656
    %v1318 = vunpack.c.l.b16 %v657
    %v1319 = vunpack.c.h.b16 %v657
    %v1320 = vunpack.c.l.b16 %v658
    %v1321 = vunpack.c.h.b16 %v658
    %v1322 = vunpack.c.l.b16 %v659
    %v1323 = vunpack.c.h.b16 %v659
    %v1324 = vunpack.c.l.b16 %v660
    %v1325 = vunpack.c.h.b16 %v660
    %v1326 = vunpack.c.l.b16 %v661
    %v1327 = vunpack.c.h.b16 %v661
    %v1328 = vunpack.c.l.b16 %v662
    %v1329 = vunpack.c.h.b16 %v662
    %v1330 = vunpack.c.l.b16 %v663
    %v1331 = vunpack.c.h.b16 %v663
    %v1332 = vunpack.c.l.b16 %v664
    %v1333 = vunpack.c.h.b16 %v664
    %v1334 = vunpack.c.l.b16 %v665
    %v1335 = vunpack.c.h.b16 %v665
    %v1336 = vunpack.c.l.b16 %v666
    %v1337 = vunpack.c.h.b16 %v666
    %v1338 = vunpack.c.l.b16 %v667
    %v1339 = vunpack.c.h.b16 %v667
    %v1340 = vunpack.c.l.b16 %v668
    %v1341 = vunpack.c.h.b16 %v668
    %v1342 = vunpack.c.l.b16 %v669
    %v1343 = vunpack.c.h.b16 %v669
    %v1344 = vunpack.c.l.b16 %v670
    %v1345 = vunpack.c.h.b16 %v670
    %v1346 = vunpack.c.l.b16 %v671
    %v1347 = vunpack.c.h.b16 %v671
    %v1348 = vunpack.c.l.b16 %v672
    %v1349 = vunpack.c.h.b16 %v672
    %v1350 = vunpack.c.l.b16 %v673
    %v1351 = vunpack.c.h.b16 %v673
    %v1352 = vunpack.c.l.b16 %v674
    %v1353 = vunpack.c.h.b16 %v674
    %v1354 = vunpack.c.l.b16 %v675
    %v1355 = vunpack.c.h.b16 %v675
    %v1356 = vunpack.c.l.b16 %v676
    %v1357 = vunpack.c.h.b16 %v676
    %v1358 = vunpack.c.l.b16 %v677
    %v1359 = vunpack.c.h.b16 %v677
    %v1360 = vunpack.c.l.b16 %v678
    %v1361 = vunpack.c.h.b16 %v678
    %v1362 = vunpack.c.l.b16 %v679
    %v1363 = vunpack.c.h.b16 %v679
    %v1364 = vunpack.c.l.b16 %v680
    %v1365 = vunpack.c.h.b16 %v680
    %v1366 = vunpack.c.l.b16 %v681
    %v1367 = vunpack.c.h.b16 %v681
    %v1368 = vunpack.c.l.b16 %v682
    %v1369 = vunpack.c.h.b16 %v682
    %v1370 = vunpack.c.l.b16 %v683
    %v1371 = vunpack.c.h.b16 %v683
    %v1372 = vunpack.c.l.b16 %v684
    %v1373 = vunpack.c.h.b16 %v684
    %v1374 = vunpack.c.l.b16 %v685
    %v1375 = vunpack.c.h.b16 %v685
    %v1376 = vunpack.c.l.b16 %v686
    %v1377 = vunpack.c.h.b16 %v686
    %v1378 = vunpack.c.l.b16 %v687
    %v1379 = vunpack.c.h.b16 %v687
    %v1380 = vunpack.c.l.b16 %v688
    %v1381 = vunpack.c.h.b16 %v688
    %v1382 = vunpack.c.l.b16 %v689
    %v1383 = vunpack.c.h.b16 %v689
    %v1384 = vunpack.c.l.b16 %v690
    %v1385 = vunpack.c.h.b16 %v690
    %v1386 = vunpack.c.l.b16 %v691
    %v1387 = vunpack.c.h.b16 %v691
    %v1388 = vunpack.c.l.b16 %v692
    %v1389 = vunpack.c.h.b16 %v692
    %v1390 = vunpack.c.l.b16 %v693
    %v1391 = vunpack.c.h.b16 %v693
    %v1392 = vunpack.c.l.b16 %v694
    %v1393 = vunpack.c.h.b16 %v694
    %v1394 = vunpack.c.l.b16 %v695
    %v1395 = vunpack.c.h.b16 %v695
    %v1396 = vunpack.c.l.b16 %v696
    %v1397 = vunpack.c.h.b16 %v696
    %v1398 = vunpack.c.l.b16 %v697
    %v1399 = vunpack.c.h.b16 %v697
    %v1400 = vunpack.c.l.b16 %v698
    %v1401 = vunpack.c.h.b16 %v698
    %v1402 = vunpack.c.l.b16 %v699
    %v1403 = vunpack.c.h.b16 %v699
    %v1404 = vunpack.c.l.b16 %v700
    %v1405 = vunpack.c.h.b16 %v700
    %v1406 = vunpack.c.l.b16 %v701
    %v1407 = vunpack.c.h.b16 %v701
    %v1408 = vunpack.c.l.b16 %v702
    %v1409 = vunpack.c.h.b16 %v702
    %v1410 = vunpack.c.l.b16 %v703
    %v1411 = vunpack.c.h.b16 %v703
    %v1412 = vunpack.c.l.b16 %v704
    %v1413 = vunpack.c.h.b16 %v704
    %v1414 = vunpack.c.l.b16 %v705
    %v1415 = vunpack.c.h.b16 %v705
    %v1416 = vunpack.c.l.b16 %v706
    %v1417 = vunpack.c.h.b16 %v706
    %v1418 = vunpack.c.l.b16 %v707
    %v1419 = vunpack.c.h.b16 %v707
    %v1420 = vunpack.c.l.b16 %v708
    %v1421 = vunpack.c.h.b16 %v708
    %v1422 = vunpack.c.l.b16 %v709
    %v1423 = vunpack.c.h.b16 %v709
    %v1424 = vunpack.c.l.b16 %v710
    %v1425 = vunpack.c.h.b16 %v710
    %v1426 = vunpack.c.l.b16 %v711
    %v1427 = vunpack.c.h.b16 %v711
    %v1428 = vunpack.c.l.b16 %v712
    %v1429 = vunpack.c.h.b16 %v712
    %v1430 = vunpack.c.l.b16 %v713
    %v1431 = vunpack.c.h.b16 %v713
    %v1432 = vunpack.c.l.b16 %v714
    %v1433 = vunpack.c.h.b16 %v714
    %v1434 = vunpack.c.l.b16 %v715
    %v1435 = vunpack.c.h.b16 %v715
    %v1436 = vunpack.c.l.b16 %v716
    %v1437 = vunpack.c.h.b16 %v716
    %v1438 = vunpack.c.l.b16 %v717
    %v1439 = vunpack.c.h.b16 %v717
    %v1440 = vunpack.c.l.b16 %v718
    %v1441 = vunpack.c.h.b16 %v718
    %v1442 = vunpack.c.l.b16 %v719
    %v1443 = vunpack.c.h.b16 %v719
    %v1444 = vunpack.c.l.b16 %v720
    %v1445 = vunpack.c.h.b16 %v720
    %v1446 = vunpack.c.l.b16 %v721
    %v1447 = vunpack.c.h.b16 %v721
    %v1448 = vunpack.c.l.b16 %v722
    %v1449 = vunpack.c.h.b16 %v722
    %v1450 = vunpack.c.l.b16 %v723
    %v1451 = vunpack.c.h.b16 %v723
    %v1452 = vunpack.c.l.b16 %v724
    %v1453 = vunpack.c.h.b16 %v724
    %v1454 = vunpack.c.l.b16 %v725
    %v1455 = vunpack.c.h.b16 %v725
    %v1456 = vunpack.c.l.b16 %v726
    %v1457 = vunpack.c.h.b16 %v726
    %v1458 = vunpack.c.l.b16 %v727
    %v1459 = vunpack.c.h.b16 %v727
    %v1460 = vunpack.c.l.b16 %v728
    %v1461 = vunpack.c.h.b16 %v728
    %v1462 = vunpack.c.l.b16 %v729
    %v1463 = vunpack.c.h.b16 %v729
    %v1464 = vunpack.c.l.b16 %v730
    %v1465 = vunpack.c.h.b16 %v730
    %v1466 = vunpack.c.l.b16 %v731
    %v1467 = vunpack.c.h.b16 %v731
    %v1468 = vunpack.c.l.b16 %v732
    %v1469 = vunpack.c.h.b16 %v732
    %v1470 = vunpack.c.l.b16 %v733
    %v1471 = vunpack.c.h.b16 %v733
    %v1472 = vunpack.c.l.b16 %v734
    %v1473 = vunpack.c.h.b16 %v734
    %v1474 = vunpack.c.l.b16 %v735
    %v1475 = vunpack.c.h.b16 %v735
    %v1476 = vunpack.c.l.b16 %v736
    %v1477 = vunpack.c.h.b16 %v736
    %v1478 = vunpack.c.l.b16 %v737
    %v1479 = vunpack.c.h.b16 %v737
    %v1480 = vunpack.c.l.b16 %v738
    %v1481 = vunpack.c.h.b16 %v738
    %v1482 = vunpack.c.l.b16 %v739
    %v1483 = vunpack.c.h.b16 %v739
    %v1484 = vunpack.c.l.b16 %v740
    %v1485 = vunpack.c.h.b16 %v740
    %v1486 = vunpack.c.l.b16 %v741
    %v1487 = vunpack.c.h.b16 %v741
    %v1488 = vunpack.c.l.b16 %v742
    %v1489 = vunpack.c.h.b16 %v742
    %v1490 = vunpack.c.l.b16 %v743
    %v1491 = vunpack.c.h.b16 %v743
    %v1492 = vunpack.c.l.b16 %v744
    %v1493 = vunpack.c.h.b16 %v744
    %v1494 = vunpack.c.l.b16 %v745
    %v1495 = vunpack.c.h.b16 %v745
    %v1496 = vunpack.c.l.b16 %v746
    %v1497 = vunpack.c.h.b16 %v746
    %v1498 = vunpack.c.l.b16 %v747
    %v1499 = vunpack.c.h.b16 %v747
    %v1500 = vunpack.c.l.b16 %v748
    %v1501 = vunpack.c.h.b16 %v748
    %v1502 = vunpack.c.l.b16 %v749
    %v1503 = vunpack.c.h.b16 %v749
    %v1504 = vunpack.c.l.b16 %v750
    %v1505 = vunpack.c.h.b16 %v750
    %v1506 = vunpack.c.l.b16 %v751
    %v1507 = vunpack.c.h.b16 %v751
    %v1508 = vunpack.c.l.b16 %v752
    %v1509 = vunpack.c.h.b16 %v752
    %v1510 = vunpack.c.l.b16 %v753
    %v1511 = vunpack.c.h.b16 %v753
    %v1512 = vunpack.c.l.b16 %v754
    %v1513 = vunpack.c.h.b16 %v754
    %v1514 = vunpack.c.l.b16 %v755
    %v1515 = vunpack.c.h.b16 %v755
    %v1516 = vunpack.c.l.b16 %v756
    %v1517 = vunpack.c.h.b16 %v756
    %v1518 = vunpack.c.l.b16 %v757
    %v1519 = vunpack.c.h.b16 %v757
    %v1520 = vunpack.c.l.b16 %v758
    %v1521 = vunpack.c.h.b16 %v758
    %v1522 = vunpack.c.l.b16 %v759
    %v1523 = vunpack.c.h.b16 %v759
    %v1524 = vunpack.c.l.b16 %v760
    %v1525 = vunpack.c.h.b16 %v760
    %v1526 = vunpack.c.l.b16 %v761
    %v1527 = vunpack.c.h.b16 %v761
    %v1528 = vunpack.c.l.b16 %v762
    %v1529 = vunpack.c.h.b16 %v762
    %v1530 = vunpack.c.l.b16 %v763
    %v1531 = vunpack.c.h.b16 %v763
    %v1532 = vunpack.c.l.b16 %v764
    %v1533 = vunpack.c.h.b16 %v764
    %v1534 = vunpack.c.l.b16 %v765
    %v1535 = vunpack.c.h.b16 %v765
    %v1536 = vunpack.c.l.b16 %v766
    %v1537 = vunpack.c.h.b16 %v766
    %v1538 = vunpack.c.l.b16 %v767
    %v1539 = vunpack.c.h.b16 %v767
    %v1540 = vunpack.c.l.b16 %v768
    %v1541 = vunpack.c.h.b16 %v768
    %v1542 = vunpack.c.l.b16 %v769
    %v1543 = vunpack.c.h.b16 %v769
    %v1544 = vunpack.c.l.b16 %v770
    %v1545 = vunpack.c.h.b16 %v770
    %v1546 = vunpack.c.l.b16 %v771
    %v1547 = vunpack.c.h.b16 %v771
    %v1548 = vunpack.c.l.b16 %v772
    %v1549 = vunpack.c.h.b16 %v772
    %v1550 = vunpack.c.l.b16 %v773
    %v1551 = vunpack.c.h.b16 %v773
    %v1552 = vunpack.c.l.b16 %v774
    %v1553 = vunpack.c.h.b16 %v774
    %v1554 = vunpack.c.l.b16 %v775
    %v1555 = vunpack.c.h.b16 %v775
    %v1556 = vunpack.c.l.b16 %v776
    %v1557 = vunpack.c.h.b16 %v776
    %v1558 = vunpack.c.l.b16 %v777
    %v1559 = vunpack.c.h.b16 %v777
    %v1560 = vunpack.c.l.b16 %v778
    %v1561 = vunpack.c.h.b16 %v778
    %v1562 = vunpack.c.l.b16 %v779
    %v1563 = vunpack.c.h.b16 %v779
    %v1564 = vunpack.c.l.b16 %v780
    %v1565 = vunpack.c.h.b16 %v780
    %v1566 = vunpack.c.l.b16 %v781
    %v1567 = vunpack.c.h.b16 %v781
    %v1568 = vunpack.c.l.b16 %v782
    %v1569 = vunpack.c.h.b16 %v782
    %v1570 = vunpack.c.l.b16 %v783
    %v1571 = vunpack.c.h.b16 %v783
    %v1572 = vunpack.c.l.b16 %v784
    %v1573 = vunpack.c.h.b16 %v784
    %v1574 = vunpack.c.l.b16 %v785
    %v1575 = vunpack.c.h.b16 %v785
    %v1576 = vpack.c.b16 %v1068, %v1064
    %v1577 = vpack.c.b16 %v1069, %v1065
    %v1578 = vpack.c.b16 %v1070, %v1066
    %v1579 = vpack.c.b16 %v1071, %v1067
    %v1580 = vpack.c.b16 %v1076, %v1072
    %v1581 = vpack.c.b16 %v1077, %v1073
    %v1582 = vpack.c.b16 %v1078, %v1074
    %v1583 = vpack.c.b16 %v1079, %v1075
    %v1584 = vpack.c.b16 %v1084, %v1080
    %v1585 = vpack.c.b16 %v1085, %v1081
    %v1586 = vpack.c.b16 %v1086, %v1082
    %v1587 = vpack.c.b16 %v1087, %v1083
    %v1588 = vpack.c.b16 %v1092, %v1088
    %v1589 = vpack.c.b16 %v1093, %v1089
    %v1590 = vpack.c.b16 %v1094, %v1090
    %v1591 = vpack.c.b16 %v1095, %v1091
    %v1592 = vpack.c.b16 %v1100, %v1096
    %v1593 = vpack.c.b16 %v1101, %v1097
    %v1594 = vpack.c.b16 %v1102, %v1098
    %v1595 = vpack.c.b16 %v1103, %v1099
    %v1596 = vpack.c.b16 %v1108, %v1104
    %v1597 = vpack.c.b16 %v1109, %v1105
    %v1598 = vpack.c.b16 %v1110, %v1106
    %v1599 = vpack.c.b16 %v1111, %v1107
    %v1600 = vpack.c.b16 %v1116, %v1112
    %v1601 = vpack.c.b16 %v1117, %v1113
    %v1602 = vpack.c.b16 %v1118, %v1114
    %v1603 = vpack.c.b16 %v1119, %v1115
    %v1604 = vpack.c.b16 %v1124, %v1120
    %v1605 = vpack.c.b16 %v1125, %v1121
    %v1606 = vpack.c.b16 %v1126, %v1122
    %v1607 = vpack.c.b16 %v1127, %v1123
    %v1608 = vpack.c.b16 %v1132, %v1128
    %v1609 = vpack.c.b16 %v1133, %v1129
    %v1610 = vpack.c.b16 %v1134, %v1130
    %v1611 = vpack.c.b16 %v1135, %v1131
    %v1612 = vpack.c.b16 %v1140, %v1136
    %v1613 = vpack.c.b16 %v1141, %v1137
    %v1614 = vpack.c.b16 %v1142, %v1138
    %v1615 = vpack.c.b16 %v1143, %v1139
    %v1616 = vpack.c.b16 %v1148, %v1144
    %v1617 = vpack.c.b16 %v1149, %v1145
    %v1618 = vpack.c.b16 %v1150, %v1146
    %v1619 = vpack.c.b16 %v1151, %v1147
    %v1620 = vpack.c.b16 %v1156, %v1152
    %v1621 = vpack.c.b16 %v1157, %v1153
    %v1622 = vpack.c.b16 %v1158, %v1154
    %v1623 = vpack.c.b16 %v1159, %v1155
    %v1624 = vpack.c.b16 %v1164, %v1160
    %v1625 = vpack.c.b16 %v1165, %v1161
    %v1626 = vpack.c.b16 %v1166, %v1162
    %v1627 = vpack.c.b16 %v1167, %v1163
    %v1628 = vpack.c.b16 %v1172, %v1168
    %v1629 = vpack.c.b16 %v1173, %v1169
    %v1630 = vpack.c.b16 %v1174, %v1170
    %v1631 = vpack.c.b16 %v1175, %v1171
    %v1632 = vpack.c.b16 %v1180, %v1176
    %v1633 = vpack.c.b16 %v1181, %v1177
    %v1634 = vpack.c.b16 %v1182, %v1178
    %v1635 = vpack.c.b16 %v1183, %v1179
    %v1636 = vpack.c.b16 %v1188, %v1184
    %v1637 = vpack.c.b16 %v1189, %v1185
    %v1638 = vpack.c.b16 %v1190, %v1186
    %v1639 = vpack.c.b16 %v1191, %v1187
    %v1640 = vpack.c.b16 %v1196, %v1192
    %v1641 = vpack.c.b16 %v1197, %v1193
    %v1642 = vpack.c.b16 %v1198, %v1194
    %v1643 = vpack.c.b16 %v1199, %v1195
    %v1644 = vpack.c.b16 %v1204, %v1200
    %v1645 = vpack.c.b16 %v1205, %v1201
    %v1646 = vpack.c.b16 %v1206, %v1202
    %v1647 = vpack.c.b16 %v1207, %v1203
    %v1648 = vpack.c.b16 %v1212, %v1208
    %v1649 = vpack.c.b16 %v1213, %v1209
    %v1650 = vpack.c.b16 %v1214, %v1210
    %v1651 = vpack.c.b16 %v1215, %v1211
    %v1652 = vpack.c.b16 %v1220, %v1216
    %v1653 = vpack.c.b16 %v1221, %v1217
    %v1654 = vpack.c.b16 %v1222, %v1218
    %v1655 = vpack.c.b16 %v1223, %v1219
    %v1656 = vpack.c.b16 %v1228, %v1224
    %v1657 = vpack.c.b16 %v1229, %v1225
    %v1658 = vpack.c.b16 %v1230, %v1226
    %v1659 = vpack.c.b16 %v1231, %v1227
    %v1660 = vpack.c.b16 %v1236, %v1232
    %v1661 = vpack.c.b16 %v1237, %v1233
    %v1662 = vpack.c.b16 %v1238, %v1234
    %v1663 = vpack.c.b16 %v1239, %v1235
    %v1664 = vpack.c.b16 %v1244, %v1240
    %v1665 = vpack.c.b16 %v1245, %v1241
    %v1666 = vpack.c.b16 %v1246, %v1242
    %v1667 = vpack.c.b16 %v1247, %v1243
    %v1668 = vpack.c.b16 %v1252, %v1248
    %v1669 = vpack.c.b16 %v1253, %v1249
    %v1670 = vpack.c.b16 %v1254, %v1250
    %v1671 = vpack.c.b16 %v1255, %v1251
    %v1672 = vpack.c.b16 %v1260, %v1256
    %v1673 = vpack.c.b16 %v1261, %v1257
    %v1674 = vpack.c.b16 %v1262, %v1258
    %v1675 = vpack.c.b16 %v1263, %v1259
    %v1676 = vpack.c.b16 %v1268, %v1264
    %v1677 = vpack.c.b16 %v1269, %v1265
    %v1678 = vpack.c.b16 %v1270, %v1266
    %v1679 = vpack.c.b16 %v1271, %v1267
    %v1680 = vpack.c.b16 %v1276, %v1272
    %v1681 = vpack.c.b16 %v1277, %v1273
    %v1682 = vpack.c.b16 %v1278, %v1274
    %v1683 = vpack.c.b16 %v1279, %v1275
    %v1684 = vpack.c.b16 %v1284, %v1280
    %v1685 = vpack.c.b16 %v1285, %v1281
    %v1686 = vpack.c.b16 %v1286, %v1282
    %v1687 = vpack.c.b16 %v1287, %v1283
    %v1688 = vpack.c.b16 %v1292, %v1288
    %v1689 = vpack.c.b16 %v1293, %v1289
    %v1690 = vpack.c.b16 %v1294, %v1290
    %v1691 = vpack.c.b16 %v1295, %v1291
    %v1692 = vpack.c.b16 %v1300, %v1296
    %v1693 = vpack.c.b16 %v1301, %v1297
    %v1694 = vpack.c.b16 %v1302, %v1298
    %v1695 = vpack.c.b16 %v1303, %v1299
    %v1696 = vpack.c.b16 %v1308, %v1304
    %v1697 = vpack.c.b16 %v1309, %v1305
    %v1698 = vpack.c.b16 %v1310, %v1306
    %v1699 = vpack.c.b16 %v1311, %v1307
    %v1700 = vpack.c.b16 %v1316, %v1312
    %v1701 = vpack.c.b16 %v1317, %v1313
    %v1702 = vpack.c.b16 %v1318, %v1314
    %v1703 = vpack.c.b16 %v1319, %v1315
    %v1704 = vpack.c.b16 %v1324, %v1320
    %v1705 = vpack.c.b16 %v1325, %v1321
    %v1706 = vpack.c.b16 %v1326, %v1322
    %v1707 = vpack.c.b16 %v1327, %v1323
    %v1708 = vpack.c.b16 %v1332, %v1328
    %v1709 = vpack.c.b16 %v1333, %v1329
    %v1710 = vpack.c.b16 %v1334, %v1330
    %v1711 = vpack.c.b16 %v1335, %v1331
    %v1712 = vpack.c.b16 %v1340, %v1336
    %v1713 = vpack.c.b16 %v1341, %v1337
    %v1714 = vpack.c.b16 %v1342, %v1338
    %v1715 = vpack.c.b16 %v1343, %v1339
    %v1716 = vpack.c.b16 %v1348, %v1344
    %v1717 = vpack.c.b16 %v1349, %v1345
    %v1718 = vpack.c.b16 %v1350, %v1346
    %v1719 = vpack.c.b16 %v1351, %v1347
    %v1720 = vpack.c.b16 %v1356, %v1352
    %v1721 = vpack.c.b16 %v1357, %v1353
    %v1722 = vpack.c.b16 %v1358, %v1354
    %v1723 = vpack.c.b16 %v1359, %v1355
    %v1724 = vpack.c.b16 %v1364, %v1360
    %v1725 = vpack.c.b16 %v1365, %v1361
    %v1726 = vpack.c.b16 %v1366, %v1362
    %v1727 = vpack.c.b16 %v1367, %v1363
    %v1728 = vpack.c.b16 %v1372, %v1368
    %v1729 = vpack.c.b16 %v1373, %v1369
    %v1730 = vpack.c.b16 %v1374, %v1370
    %v1731 = vpack.c.b16 %v1375, %v1371
    %v1732 = vpack.c.b16 %v1380, %v1376
    %v1733 = vpack.c.b16 %v1381, %v1377
    %v1734 = vpack.c.b16 %v1382, %v1378
    %v1735 = vpack.c.b16 %v1383, %v1379
    %v1736 = vpack.c.b16 %v1388, %v1384
    %v1737 = vpack.c.b16 %v1389, %v1385
    %v1738 = vpack.c.b16 %v1390, %v1386
    %v1739 = vpack.c.b16 %v1391, %v1387
    %v1740 = vpack.c.b16 %v1396, %v1392
    %v1741 = vpack.c.b16 %v1397, %v1393
    %v1742 = vpack.c.b16 %v1398, %v1394
    %v1743 = vpack.c.b16 %v1399, %v1395
    %v1744 = vpack.c.b16 %v1404, %v1400
    %v1745 = vpack.c.b16 %v1405, %v1401
    %v1746 = vpack.c.b16 %v1406, %v1402
    %v1747 = vpack.c.b16 %v1407, %v1403
    %v1748 = vpack.c.b16 %v1412, %v1408
    %v1749 = vpack.c.b16 %v1413, %v1409
    %v1750 = vpack.c.b16 %v1414, %v1410
    %v1751 = vpack.c.b16 %v1415, %v1411
    %v1752 = vpack.c.b16 %v1420, %v1416
    %v1753 = vpack.c.b16 %v1421, %v1417
    %v1754 = vpack.c.b16 %v1422, %v1418
    %v1755 = vpack.c.b16 %v1423, %v1419
    %v1756 = vpack.c.b16 %v1428, %v1424
    %v1757 = vpack.c.b16 %v1429, %v1425
    %v1758 = vpack.c.b16 %v1430, %v1426
    %v1759 = vpack.c.b16 %v1431, %v1427
    %v1760 = vpack.c.b16 %v1436, %v1432
    %v1761 = vpack.c.b16 %v1437, %v1433
    %v1762 = vpack.c.b16 %v1438, %v1434
    %v1763 = vpack.c.b16 %v1439, %v1435
    %v1764 = vpack.c.b16 %v1444, %v1440
    %v1765 = vpack.c.b16 %v1445, %v1441
    %v1766 = vpack.c.b16 %v1446, %v1442
    %v1767 = vpack.c.b16 %v1447, %v1443
    %v1768 = vpack.c.b16 %v1452, %v1448
    %v1769 = vpack.c.b16 %v1453, %v1449
    %v1770 = vpack.c.b16 %v1454, %v1450
    %v1771 = vpack.c.b16 %v1455, %v1451
    %v1772 = vpack.c.b16 %v1460, %v1456
    %v1773 = vpack.c.b16 %v1461, %v1457
    %v1774 = vpack.c.b16 %v1462, %v1458
    %v1775 = vpack.c.b16 %v1463, %v1459
    %v1776 = vpack.c.b16 %v1468, %v1464
    %v1777 = vpack.c.b16 %v1469, %v1465
    %v1778 = vpack.c.b16 %v1470, %v1466
    %v1779 = vpack.c.b16 %v1471, %v1467
    %v1780 = vpack.c.b16 %v1476, %v1472
    %v1781 = vpack.c.b16 %v1477, %v1473
    %v1782 = vpack.c.b16 %v1478, %v1474
    %v1783 = vpack.c.b16 %v1479, %v1475
    %v1784 = vpack.c.b16 %v1484, %v1480
    %v1785 = vpack.c.b16 %v1485, %v1481
    %v1786 = vpack.c.b16 %v1486, %v1482
    %v1787 = vpack.c.b16 %v1487, %v1483
    %v1788 = vpack.c.b16 %v1492, %v1488
    %v1789 = vpack.c.b16 %v1493, %v1489
    %v1790 = vpack.c.b16 %v1494, %v1490
    %v1791 = vpack.c.b16 %v1495, %v1491
    %v1792 = vpack.c.b16 %v1500, %v1496
    %v1793 = vpack.c.b16 %v1501, %v1497
    %v1794 = vpack.c.b16 %v1502, %v1498
    %v1795 = vpack.c.b16 %v1503, %v1499
    %v1796 = vpack.c.b16 %v1508, %v1504
    %v1797 = vpack.c.b16 %v1509, %v1505
    %v1798 = vpack.c.b16 %v1510, %v1506
    %v1799 = vpack.c.b16 %v1511, %v1507
    %v1800 = vpack.c.b16 %v1516, %v1512
    %v1801 = vpack.c.b16 %v1517, %v1513
    %v1802 = vpack.c.b16 %v1518, %v1514
    %v1803 = vpack.c.b16 %v1519, %v1515
    %v1804 = vpack.c.b16 %v1524, %v1520
    %v1805 = vpack.c.b16 %v1525, %v1521
    %v1806 = vpack.c.b16 %v1526, %v1522
    %v1807 = vpack.c.b16 %v1527, %v1523
    %v1808 = vpack.c.b16 %v1532, %v1528
    %v1809 = vpack.c.b16 %v1533, %v1529
    %v1810 = vpack.c.b16 %v1534, %v1530
    %v1811 = vpack.c.b16 %v1535, %v1531
    %v1812 = vpack.c.b16 %v1540, %v1536
    %v1813 = vpack.c.b16 %v1541, %v1537
    %v1814 = vpack.c.b16 %v1542, %v1538
    %v1815 = vpack.c.b16 %v1543, %v1539
    %v1816 = vpack.c.b16 %v1548, %v1544
    %v1817 = vpack.c.b16 %v1549, %v1545
    %v1818 = vpack.c.b16 %v1550, %v1546
    %v1819 = vpack.c.b16 %v1551, %v1547
    %v1820 = vpack.c.b16 %v1556, %v1552
    %v1821 = vpack.c.b16 %v1557, %v1553
    %v1822 = vpack.c.b16 %v1558, %v1554
    %v1823 = vpack.c.b16 %v1559, %v1555
    %v1824 = vpack.c.b16 %v1564, %v1560
    %v1825 = vpack.c.b16 %v1565, %v1561
    %v1826 = vpack.c.b16 %v1566, %v1562
    %v1827 = vpack.c.b16 %v1567, %v1563
    %v1828 = vpack.c.b16 %v1572, %v1568
    %v1829 = vpack.c.b16 %v1573, %v1569
    %v1830 = vpack.c.b16 %v1574, %v1570
    %v1831 = vpack.c.b16 %v1575, %v1571
    %2088 = vmatprep.subr.bf16.mxu0 %v1577
    %2089 = vmatpush1.bf16.msra.mxu0 %v1576
    %2090 = vmatprep.subr.bf16.mxu0 %v1581
    %2091 = vmatpush1.bf16.msra.mxu0 %v1580
    %2092 = vmatprep.subr.bf16.mxu0 %v1585
    %2093 = vmatpush1.bf16.msra.mxu0 %v1584
    %2094 = vmatprep.subr.bf16.mxu0 %v1589
    %2095 = vmatpush1.bf16.msra.mxu0 %v1588
    %2096 = vmatprep.subr.bf16.mxu0 %v1593
    %2097 = vmatpush1.bf16.msra.mxu0 %v1592
    %2098 = vmatprep.subr.bf16.mxu0 %v1597
    %2099 = vmatpush1.bf16.msra.mxu0 %v1596
    %2100 = vmatprep.subr.bf16.mxu0 %v1601
    %2101 = vmatpush1.bf16.msra.mxu0 %v1600
    %2102 = vmatprep.subr.bf16.mxu0 %v1605
    %2103 = vmatpush1.bf16.msra.mxu0 %v1604
    %2104 = vmatprep.subr.bf16.mxu0 %v1609
    %2105 = vmatpush1.bf16.msra.mxu0 %v1608
    %2106 = vmatprep.subr.bf16.mxu0 %v1613
    %2107 = vmatpush1.bf16.msra.mxu0 %v1612
    %2108 = vmatprep.subr.bf16.mxu0 %v1617
    %2109 = vmatpush1.bf16.msra.mxu0 %v1616
    %2110 = vmatprep.subr.bf16.mxu0 %v1621
    %2111 = vmatpush1.bf16.msra.mxu0 %v1620
    %2112 = vmatprep.subr.bf16.mxu0 %v1625
    %2113 = vmatpush1.bf16.msra.mxu0 %v1624
    %2114 = vmatprep.subr.bf16.mxu0 %v1629
    %2115 = vmatpush1.bf16.msra.mxu0 %v1628
    %2116 = vmatprep.subr.bf16.mxu0 %v1633
    %2117 = vmatpush1.bf16.msra.mxu0 %v1632
    %2118 = vmatprep.subr.bf16.mxu0 %v1637
    %2119 = vmatpush1.bf16.msra.mxu0 %v1636
    %2120 = vmatprep.mubr.bf16.mxu0 %v523
    %2121 = vmatmul.mubr.bf16.gmra.mrb[0].mxu0 %v522
    %v2122 = vpop.f32.mrb[0].mxu0
    %v2123 = vadd.f32 %v791, %v2122
    %v2124 = vpop.f32.mrb[0].mxu0
    %v2125 = vadd.f32 %v795, %v2124
    %v2126 = vpop.f32.mrb[0].mxu0
    %v2127 = vadd.f32 %v791, %v2126
    %v2128 = vpop.f32.mrb[0].mxu0
    %v2129 = vadd.f32 %v795, %v2128
    %2130 = vdwg.mxu0
    %2131 = vmatprep.subr.bf16.mxu0 %v1641
    %2132 = vmatpush1.bf16.msra.mxu0 %v1640
    %2133 = vmatprep.subr.bf16.mxu0 %v1645
    %2134 = vmatpush1.bf16.msra.mxu0 %v1644
    %2135 = vmatprep.subr.bf16.mxu0 %v1649
    %2136 = vmatpush1.bf16.msra.mxu0 %v1648
    %2137 = vmatprep.subr.bf16.mxu0 %v1653
    %2138 = vmatpush1.bf16.msra.mxu0 %v1652
    %2139 = vmatprep.subr.bf16.mxu0 %v1657
    %2140 = vmatpush1.bf16.msra.mxu0 %v1656
    %2141 = vmatprep.subr.bf16.mxu0 %v1661
    %2142 = vmatpush1.bf16.msra.mxu0 %v1660
    %2143 = vmatprep.subr.bf16.mxu0 %v1665
    %2144 = vmatpush1.bf16.msra.mxu0 %v1664
    %2145 = vmatprep.subr.bf16.mxu0 %v1669
    %2146 = vmatpush1.bf16.msra.mxu0 %v1668
    %2147 = vmatprep.subr.bf16.mxu0 %v1673
    %2148 = vmatpush1.bf16.msra.mxu0 %v1672
    %2149 = vmatprep.subr.bf16.mxu0 %v1677
    %2150 = vmatpush1.bf16.msra.mxu0 %v1676
    %2151 = vmatprep.subr.bf16.mxu0 %v1681
    %2152 = vmatpush1.bf16.msra.mxu0 %v1680
    %2153 = vmatprep.subr.bf16.mxu0 %v1685
    %2154 = vmatpush1.bf16.msra.mxu0 %v1684
    %2155 = vmatprep.subr.bf16.mxu0 %v1689
    %2156 = vmatpush1.bf16.msra.mxu0 %v1688
    %2157 = vmatprep.subr.bf16.mxu0 %v1693
    %2158 = vmatpush1.bf16.msra.mxu0 %v1692
    %2159 = vmatprep.subr.bf16.mxu0 %v1697
    %2160 = vmatpush1.bf16.msra.mxu0 %v1696
    %2161 = vmatprep.subr.bf16.mxu0 %v1701
    %2162 = vmatpush1.bf16.msra.mxu0 %v1700
    %2163 = vmatprep.mubr.bf16.mxu0 %v525
    %2164 = vmatmul.mubr.bf16.gmra.mrb[0].mxu0 %v524
    %v2165 = vpop.f32.mrb[0].mxu0
    %v2166 = vadd.f32 %v2123, %v2165
    %v2167 = vpop.f32.mrb[0].mxu0
    %v2168 = vadd.f32 %v2125, %v2167
    %v2169 = vpop.f32.mrb[0].mxu0
    %v2170 = vadd.f32 %v2127, %v2169
    %v2171 = vpop.f32.mrb[0].mxu0
    %v2172 = vadd.f32 %v2129, %v2171
    %2173 = vdwg.mxu0
    %2174 = vmatprep.subr.bf16.mxu0 %v1705
    %2175 = vmatpush1.bf16.msra.mxu0 %v1704
    %2176 = vmatprep.subr.bf16.mxu0 %v1709
    %2177 = vmatpush1.bf16.msra.mxu0 %v1708
    %2178 = vmatprep.subr.bf16.mxu0 %v1713
    %2179 = vmatpush1.bf16.msra.mxu0 %v1712
    %2180 = vmatprep.subr.bf16.mxu0 %v1717
    %2181 = vmatpush1.bf16.msra.mxu0 %v1716
    %2182 = vmatprep.subr.bf16.mxu0 %v1721
    %2183 = vmatpush1.bf16.msra.mxu0 %v1720
    %2184 = vmatprep.subr.bf16.mxu0 %v1725
    %2185 = vmatpush1.bf16.msra.mxu0 %v1724
    %2186 = vmatprep.subr.bf16.mxu0 %v1729
    %2187 = vmatpush1.bf16.msra.mxu0 %v1728
    %2188 = vmatprep.subr.bf16.mxu0 %v1733
    %2189 = vmatpush1.bf16.msra.mxu0 %v1732
    %2190 = vmatprep.subr.bf16.mxu0 %v1737
    %2191 = vmatpush1.bf16.msra.mxu0 %v1736
    %2192 = vmatprep.subr.bf16.mxu0 %v1741
    %2193 = vmatpush1.bf16.msra.mxu0 %v1740
    %2194 = vmatprep.subr.bf16.mxu0 %v1745
    %2195 = vmatpush1.bf16.msra.mxu0 %v1744
    %2196 = vmatprep.subr.bf16.mxu0 %v1749
    %2197 = vmatpush1.bf16.msra.mxu0 %v1748
    %2198 = vmatprep.subr.bf16.mxu0 %v1753
    %2199 = vmatpush1.bf16.msra.mxu0 %v1752
    %2200 = vmatprep.subr.bf16.mxu0 %v1757
    %2201 = vmatpush1.bf16.msra.mxu0 %v1756
    %2202 = vmatprep.subr.bf16.mxu0 %v1761
    %2203 = vmatpush1.bf16.msra.mxu0 %v1760
    %2204 = vmatprep.subr.bf16.mxu0 %v1765
    %2205 = vmatpush1.bf16.msra.mxu0 %v1764
    %2206 = vmatprep.mubr.bf16.mxu0 %v527
    %2207 = vmatmul.mubr.bf16.gmra.mrb[0].mxu0 %v526
    %v2208 = vpop.f32.mrb[0].mxu0
    %v2209 = vadd.f32 %v2166, %v2208
    %v2210 = vpop.f32.mrb[0].mxu0
    %v2211 = vadd.f32 %v2168, %v2210
    %v2212 = vpop.f32.mrb[0].mxu0
    %v2213 = vadd.f32 %v2170, %v2212
    %v2214 = vpop.f32.mrb[0].mxu0
    %v2215 = vadd.f32 %v2172, %v2214
    %2216 = vdwg.mxu0
    %2217 = vmatprep.subr.bf16.mxu0 %v1769
    %2218 = vmatpush1.bf16.msra.mxu0 %v1768
    %2219 = vmatprep.subr.bf16.mxu0 %v1773
    %2220 = vmatpush1.bf16.msra.mxu0 %v1772
    %2221 = vmatprep.subr.bf16.mxu0 %v1777
    %2222 = vmatpush1.bf16.msra.mxu0 %v1776
    %2223 = vmatprep.subr.bf16.mxu0 %v1781
    %2224 = vmatpush1.bf16.msra.mxu0 %v1780
    %2225 = vmatprep.subr.bf16.mxu0 %v1785
    %2226 = vmatpush1.bf16.msra.mxu0 %v1784
    %2227 = vmatprep.subr.bf16.mxu0 %v1789
    %2228 = vmatpush1.bf16.msra.mxu0 %v1788
    %2229 = vmatprep.subr.bf16.mxu0 %v1793
    %2230 = vmatpush1.bf16.msra.mxu0 %v1792
    %2231 = vmatprep.subr.bf16.mxu0 %v1797
    %2232 = vmatpush1.bf16.msra.mxu0 %v1796
    %2233 = vmatprep.subr.bf16.mxu0 %v1801
    %2234 = vmatpush1.bf16.msra.mxu0 %v1800
    %2235 = vmatprep.subr.bf16.mxu0 %v1805
    %2236 = vmatpush1.bf16.msra.mxu0 %v1804
    %2237 = vmatprep.subr.bf16.mxu0 %v1809
    %2238 = vmatpush1.bf16.msra.mxu0 %v1808
    %2239 = vmatprep.subr.bf16.mxu0 %v1813
    %2240 = vmatpush1.bf16.msra.mxu0 %v1812
    %2241 = vmatprep.subr.bf16.mxu0 %v1817
    %2242 = vmatpush1.bf16.msra.mxu0 %v1816
    %2243 = vmatprep.subr.bf16.mxu0 %v1821
    %2244 = vmatpush1.bf16.msra.mxu0 %v1820
    %2245 = vmatprep.subr.bf16.mxu0 %v1825
    %2246 = vmatpush1.bf16.msra.mxu0 %v1824
    %2247 = vmatprep.subr.bf16.mxu0 %v1829
    %2248 = vmatpush1.bf16.msra.mxu0 %v1828
    %2249 = vmatprep.mubr.bf16.mxu0 %v529
    %2250 = vmatmul.mubr.bf16.gmra.mrb[0].mxu0 %v528
    %v2251 = vpop.f32.mrb[0].mxu0
    %v2252 = vadd.f32 %v2209, %v2251
    %v2253 = vpop.f32.mrb[0].mxu0
    %v2254 = vadd.f32 %v2211, %v2253
    %v2255 = vpop.f32.mrb[0].mxu0
    %v2256 = vadd.f32 %v2213, %v2255
    %v2257 = vpop.f32.mrb[0].mxu0
    %v2258 = vadd.f32 %v2215, %v2257
    %2259 = vdwg.mxu0
    %2260 = vmatprep.subr.bf16.mxu0 %v1579
    %2261 = vmatpush1.bf16.msra.mxu0 %v1578
    %2262 = vmatprep.subr.bf16.mxu0 %v1583
    %2263 = vmatpush1.bf16.msra.mxu0 %v1582
    %2264 = vmatprep.subr.bf16.mxu0 %v1587
    %2265 = vmatpush1.bf16.msra.mxu0 %v1586
    %2266 = vmatprep.subr.bf16.mxu0 %v1591
    %2267 = vmatpush1.bf16.msra.mxu0 %v1590
    %2268 = vmatprep.subr.bf16.mxu0 %v1595
    %2269 = vmatpush1.bf16.msra.mxu0 %v1594
    %2270 = vmatprep.subr.bf16.mxu0 %v1599
    %2271 = vmatpush1.bf16.msra.mxu0 %v1598
    %2272 = vmatprep.subr.bf16.mxu0 %v1603
    %2273 = vmatpush1.bf16.msra.mxu0 %v1602
    %2274 = vmatprep.subr.bf16.mxu0 %v1607
    %2275 = vmatpush1.bf16.msra.mxu0 %v1606
    %2276 = vmatprep.subr.bf16.mxu0 %v1611
    %2277 = vmatpush1.bf16.msra.mxu0 %v1610
    %2278 = vmatprep.subr.bf16.mxu0 %v1615
    %2279 = vmatpush1.bf16.msra.mxu0 %v1614
    %2280 = vmatprep.subr.bf16.mxu0 %v1619
    %2281 = vmatpush1.bf16.msra.mxu0 %v1618
    %2282 = vmatprep.subr.bf16.mxu0 %v1623
    %2283 = vmatpush1.bf16.msra.mxu0 %v1622
    %2284 = vmatprep.subr.bf16.mxu0 %v1627
    %2285 = vmatpush1.bf16.msra.mxu0 %v1626
    %2286 = vmatprep.subr.bf16.mxu0 %v1631
    %2287 = vmatpush1.bf16.msra.mxu0 %v1630
    %2288 = vmatprep.subr.bf16.mxu0 %v1635
    %2289 = vmatpush1.bf16.msra.mxu0 %v1634
    %2290 = vmatprep.subr.bf16.mxu0 %v1639
    %2291 = vmatpush1.bf16.msra.mxu0 %v1638
    %2292 = vmatprep.mubr.bf16.mxu0 %v523
    %2293 = vmatmul.mubr.bf16.gmra.mrb[0].mxu0 %v522
    %v2294 = vpop.f32.mrb[0].mxu0
    %v2295 = vadd.f32 %v799, %v2294
    %v2296 = vpop.f32.mrb[0].mxu0
    %v2297 = vadd.f32 %v803, %v2296
    %v2298 = vpop.f32.mrb[0].mxu0
    %v2299 = vadd.f32 %v799, %v2298
    %v2300 = vpop.f32.mrb[0].mxu0
    %v2301 = vadd.f32 %v803, %v2300
    %2302 = vdwg.mxu0
    %2303 = vmatprep.subr.bf16.mxu0 %v1643
    %2304 = vmatpush1.bf16.msra.mxu0 %v1642
    %2305 = vmatprep.subr.bf16.mxu0 %v1647
    %2306 = vmatpush1.bf16.msra.mxu0 %v1646
    %2307 = vmatprep.subr.bf16.mxu0 %v1651
    %2308 = vmatpush1.bf16.msra.mxu0 %v1650
    %2309 = vmatprep.subr.bf16.mxu0 %v1655
    %2310 = vmatpush1.bf16.msra.mxu0 %v1654
    %2311 = vmatprep.subr.bf16.mxu0 %v1659
    %2312 = vmatpush1.bf16.msra.mxu0 %v1658
    %2313 = vmatprep.subr.bf16.mxu0 %v1663
    %2314 = vmatpush1.bf16.msra.mxu0 %v1662
    %2315 = vmatprep.subr.bf16.mxu0 %v1667
    %2316 = vmatpush1.bf16.msra.mxu0 %v1666
    %2317 = vmatprep.subr.bf16.mxu0 %v1671
    %2318 = vmatpush1.bf16.msra.mxu0 %v1670
    %2319 = vmatprep.subr.bf16.mxu0 %v1675
    %2320 = vmatpush1.bf16.msra.mxu0 %v1674
    %2321 = vmatprep.subr.bf16.mxu0 %v1679
    %2322 = vmatpush1.bf16.msra.mxu0 %v1678
    %2323 = vmatprep.subr.bf16.mxu0 %v1683
    %2324 = vmatpush1.bf16.msra.mxu0 %v1682
    %2325 = vmatprep.subr.bf16.mxu0 %v1687
    %2326 = vmatpush1.bf16.msra.mxu0 %v1686
    %2327 = vmatprep.subr.bf16.mxu0 %v1691
    %2328 = vmatpush1.bf16.msra.mxu0 %v1690
    %2329 = vmatprep.subr.bf16.mxu0 %v1695
    %2330 = vmatpush1.bf16.msra.mxu0 %v1694
    %2331 = vmatprep.subr.bf16.mxu0 %v1699
    %2332 = vmatpush1.bf16.msra.mxu0 %v1698
    %2333 = vmatprep.subr.bf16.mxu0 %v1703
    %2334 = vmatpush1.bf16.msra.mxu0 %v1702
    %2335 = vmatprep.mubr.bf16.mxu0 %v525
    %2336 = vmatmul.mubr.bf16.gmra.mrb[0].mxu0 %v524
    %v2337 = vpop.f32.mrb[0].mxu0
    %v2338 = vadd.f32 %v2295, %v2337
    %v2339 = vpop.f32.mrb[0].mxu0
    %v2340 = vadd.f32 %v2297, %v2339
    %v2341 = vpop.f32.mrb[0].mxu0
    %v2342 = vadd.f32 %v2299, %v2341
    %v2343 = vpop.f32.mrb[0].mxu0
    %v2344 = vadd.f32 %v2301, %v2343
    %2345 = vdwg.mxu0
    %2346 = vmatprep.subr.bf16.mxu0 %v1707
    %2347 = vmatpush1.bf16.msra.mxu0 %v1706
    %2348 = vmatprep.subr.bf16.mxu0 %v1711
    %2349 = vmatpush1.bf16.msra.mxu0 %v1710
    %2350 = vmatprep.subr.bf16.mxu0 %v1715
    %2351 = vmatpush1.bf16.msra.mxu0 %v1714
    %2352 = vmatprep.subr.bf16.mxu0 %v1719
    %2353 = vmatpush1.bf16.msra.mxu0 %v1718
    %2354 = vmatprep.subr.bf16.mxu0 %v1723
    %2355 = vmatpush1.bf16.msra.mxu0 %v1722
    %2356 = vmatprep.subr.bf16.mxu0 %v1727
    %2357 = vmatpush1.bf16.msra.mxu0 %v1726
    %2358 = vmatprep.subr.bf16.mxu0 %v1731
    %2359 = vmatpush1.bf16.msra.mxu0 %v1730
    %2360 = vmatprep.subr.bf16.mxu0 %v1735
    %2361 = vmatpush1.bf16.msra.mxu0 %v1734
    %2362 = vmatprep.subr.bf16.mxu0 %v1739
    %2363 = vmatpush1.bf16.msra.mxu0 %v1738
    %2364 = vmatprep.subr.bf16.mxu0 %v1743
    %2365 = vmatpush1.bf16.msra.mxu0 %v1742
    %2366 = vmatprep.subr.bf16.mxu0 %v1747
    %2367 = vmatpush1.bf16.msra.mxu0 %v1746
    %2368 = vmatprep.subr.bf16.mxu0 %v1751
    %2369 = vmatpush1.bf16.msra.mxu0 %v1750
    %2370 = vmatprep.subr.bf16.mxu0 %v1755
    %2371 = vmatpush1.bf16.msra.mxu0 %v1754
    %2372 = vmatprep.subr.bf16.mxu0 %v1759
    %2373 = vmatpush1.bf16.msra.mxu0 %v1758
    %2374 = vmatprep.subr.bf16.mxu0 %v1763
    %2375 = vmatpush1.bf16.msra.mxu0 %v1762
    %2376 = vmatprep.subr.bf16.mxu0 %v1767
    %2377 = vmatpush1.bf16.msra.mxu0 %v1766
    %2378 = vmatprep.mubr.bf16.mxu0 %v527
    %2379 = vmatmul.mubr.bf16.gmra.mrb[0].mxu0 %v526
    %v2380 = vpop.f32.mrb[0].mxu0
    %v2381 = vadd.f32 %v2338, %v2380
    %v2382 = vpop.f32.mrb[0].mxu0
    %v2383 = vadd.f32 %v2340, %v2382
    %v2384 = vpop.f32.mrb[0].mxu0
    %v2385 = vadd.f32 %v2342, %v2384
    %v2386 = vpop.f32.mrb[0].mxu0
    %v2387 = vadd.f32 %v2344, %v2386
    %2388 = vdwg.mxu0
    %2389 = vmatprep.subr.bf16.mxu0 %v1771
    %2390 = vmatpush1.bf16.msra.mxu0 %v1770
    %2391 = vmatprep.subr.bf16.mxu0 %v1775
    %2392 = vmatpush1.bf16.msra.mxu0 %v1774
    %2393 = vmatprep.subr.bf16.mxu0 %v1779
    %2394 = vmatpush1.bf16.msra.mxu0 %v1778
    %2395 = vmatprep.subr.bf16.mxu0 %v1783
    %2396 = vmatpush1.bf16.msra.mxu0 %v1782
    %2397 = vmatprep.subr.bf16.mxu0 %v1787
    %2398 = vmatpush1.bf16.msra.mxu0 %v1786
    %2399 = vmatprep.subr.bf16.mxu0 %v1791
    %2400 = vmatpush1.bf16.msra.mxu0 %v1790
    %2401 = vmatprep.subr.bf16.mxu0 %v1795
    %2402 = vmatpush1.bf16.msra.mxu0 %v1794
    %2403 = vmatprep.subr.bf16.mxu0 %v1799
    %2404 = vmatpush1.bf16.msra.mxu0 %v1798
    %2405 = vmatprep.subr.bf16.mxu0 %v1803
    %2406 = vmatpush1.bf16.msra.mxu0 %v1802
    %2407 = vmatprep.subr.bf16.mxu0 %v1807
    %2408 = vmatpush1.bf16.msra.mxu0 %v1806
    %2409 = vmatprep.subr.bf16.mxu0 %v1811
    %2410 = vmatpush1.bf16.msra.mxu0 %v1810
    %2411 = vmatprep.subr.bf16.mxu0 %v1815
    %2412 = vmatpush1.bf16.msra.mxu0 %v1814
    %2413 = vmatprep.subr.bf16.mxu0 %v1819
    %2414 = vmatpush1.bf16.msra.mxu0 %v1818
    %2415 = vmatprep.subr.bf16.mxu0 %v1823
    %2416 = vmatpush1.bf16.msra.mxu0 %v1822
    %2417 = vmatprep.subr.bf16.mxu0 %v1827
    %2418 = vmatpush1.bf16.msra.mxu0 %v1826
    %2419 = vmatprep.subr.bf16.mxu0 %v1831
    %2420 = vmatpush1.bf16.msra.mxu0 %v1830
    %2421 = vmatprep.mubr.bf16.mxu0 %v529
    %2422 = vmatmul.mubr.bf16.gmra.mrb[0].mxu0 %v528
    %v2423 = vpop.f32.mrb[0].mxu0
    %v2424 = vadd.f32 %v2381, %v2423
    %v2425 = vpop.f32.mrb[0].mxu0
    %v2426 = vadd.f32 %v2383, %v2425
    %v2427 = vpop.f32.mrb[0].mxu0
    %v2428 = vadd.f32 %v2385, %v2427
    %v2429 = vpop.f32.mrb[0].mxu0
    %v2430 = vadd.f32 %v2387, %v2429
    %2431 = vdwg.mxu0
    %v2432 = vmax.f32 %v2252, 0.0
    %v2433 = vmax.f32 %v2254, 0.0
    %v2434 = vmax.f32 %v2424, 0.0
    %v2435 = vmax.f32 %v2426, 0.0
    %v2436 = vmax.f32 %v2256, 0.0
    %v2437 = vmax.f32 %v2258, 0.0
    %v2438 = vmax.f32 %v2428, 0.0
    %v2439 = vmax.f32 %v2430, 0.0
    %v2440 = vpack.c.bf16 %v2436, %v2432
    %v2441 = vpack.c.bf16 %v2437, %v2433
    %v2442 = vpack.c.bf16 %v2438, %v2434
    %v2443 = vpack.c.bf16 %v2439, %v2435
    %v2444 = vld [vmem:[#allocation10] sm:$0xff]
    %v2445 = vld [vmem:[#allocation10 + $0x8] sm:$0xff]
    %v2446 = vld [vmem:[#allocation10 + $0x10] sm:$0xff]
    %v2447 = vld [vmem:[#allocation10 + $0x18] sm:$0xff]
    %v2448 = vld [vmem:[#allocation10 + $0x20] sm:$0xff]
    %v2449 = vld [vmem:[#allocation10 + $0x28] sm:$0xff]
    %v2450 = vld [vmem:[#allocation10 + $0x30] sm:$0xff]
    %v2451 = vld [vmem:[#allocation10 + $0x38] sm:$0xff]
    %v2452 = vld [vmem:[#allocation10 + $0x40] sm:$0xff]
    %v2453 = vld [vmem:[#allocation10 + $0x48] sm:$0xff]
    %v2454 = vld [vmem:[#allocation10 + $0x50] sm:$0xff]
    %v2455 = vld [vmem:[#allocation10 + $0x58] sm:$0xff]
    %v2456 = vld [vmem:[#allocation10 + $0x60] sm:$0xff]
    %v2457 = vld [vmem:[#allocation10 + $0x68] sm:$0xff]
    %v2458 = vld [vmem:[#allocation10 + $0x70] sm:$0xff]
    %v2459 = vld [vmem:[#allocation10 + $0x78] sm:$0xff]
    %v2460 = vld [vmem:[#allocation10 + $0x80] sm:$0xff]
    %v2461 = vld [vmem:[#allocation10 + $0x88] sm:$0xff]
    %v2462 = vld [vmem:[#allocation10 + $0x90] sm:$0xff]
    %v2463 = vld [vmem:[#allocation10 + $0x98] sm:$0xff]
    %v2464 = vld [vmem:[#allocation10 + $0xa0] sm:$0xff]
    %v2465 = vld [vmem:[#allocation10 + $0xa8] sm:$0xff]
    %v2466 = vld [vmem:[#allocation10 + $0xb0] sm:$0xff]
    %v2467 = vld [vmem:[#allocation10 + $0xb8] sm:$0xff]
    %v2468 = vld [vmem:[#allocation10 + $0xc0] sm:$0xff]
    %v2469 = vld [vmem:[#allocation10 + $0xc8] sm:$0xff]
    %v2470 = vld [vmem:[#allocation10 + $0xd0] sm:$0xff]
    %v2471 = vld [vmem:[#allocation10 + $0xd8] sm:$0xff]
    %v2472 = vld [vmem:[#allocation10 + $0xe0] sm:$0xff]
    %v2473 = vld [vmem:[#allocation10 + $0xe8] sm:$0xff]
    %v2474 = vld [vmem:[#allocation10 + $0xf0] sm:$0xff]
    %v2475 = vld [vmem:[#allocation10 + $0xf8] sm:$0xff]
    %v2476 = vld [vmem:[#allocation10 + $0x100] sm:$0xff]
    %v2477 = vld [vmem:[#allocation10 + $0x108] sm:$0xff]
    %v2478 = vld [vmem:[#allocation10 + $0x110] sm:$0xff]
    %v2479 = vld [vmem:[#allocation10 + $0x118] sm:$0xff]
    %v2480 = vld [vmem:[#allocation10 + $0x120] sm:$0xff]
    %v2481 = vld [vmem:[#allocation10 + $0x128] sm:$0xff]
    %v2482 = vld [vmem:[#allocation10 + $0x130] sm:$0xff]
    %v2483 = vld [vmem:[#allocation10 + $0x138] sm:$0xff]
    %v2484 = vld [vmem:[#allocation10 + $0x140] sm:$0xff]
    %v2485 = vld [vmem:[#allocation10 + $0x148] sm:$0xff]
    %v2486 = vld [vmem:[#allocation10 + $0x150] sm:$0xff]
    %v2487 = vld [vmem:[#allocation10 + $0x158] sm:$0xff]
    %v2488 = vld [vmem:[#allocation10 + $0x160] sm:$0xff]
    %v2489 = vld [vmem:[#allocation10 + $0x168] sm:$0xff]
    %v2490 = vld [vmem:[#allocation10 + $0x170] sm:$0xff]
    %v2491 = vld [vmem:[#allocation10 + $0x178] sm:$0xff]
    %v2492 = vld [vmem:[#allocation10 + $0x180] sm:$0xff]
    %v2493 = vld [vmem:[#allocation10 + $0x188] sm:$0xff]
    %v2494 = vld [vmem:[#allocation10 + $0x190] sm:$0xff]
    %v2495 = vld [vmem:[#allocation10 + $0x198] sm:$0xff]
    %v2496 = vld [vmem:[#allocation10 + $0x1a0] sm:$0xff]
    %v2497 = vld [vmem:[#allocation10 + $0x1a8] sm:$0xff]
    %v2498 = vld [vmem:[#allocation10 + $0x1b0] sm:$0xff]
    %v2499 = vld [vmem:[#allocation10 + $0x1b8] sm:$0xff]
    %v2500 = vld [vmem:[#allocation10 + $0x1c0] sm:$0xff]
    %v2501 = vld [vmem:[#allocation10 + $0x1c8] sm:$0xff]
    %v2502 = vld [vmem:[#allocation10 + $0x1d0] sm:$0xff]
    %v2503 = vld [vmem:[#allocation10 + $0x1d8] sm:$0xff]
    %v2504 = vld [vmem:[#allocation10 + $0x1e0] sm:$0xff]
    %v2505 = vld [vmem:[#allocation10 + $0x1e8] sm:$0xff]
    %v2506 = vld [vmem:[#allocation10 + $0x1f0] sm:$0xff]
    %v2507 = vld [vmem:[#allocation10 + $0x1f8] sm:$0xff]
    %v2508 = vld [vmem:[%s6] sm:$0x3]
    %v2510 = vlaneseq
    %v2511 = vshrl.u32 %v2510, 7
    %v2512 = vsub.s32 0, %v2511
    %v2513 = vrot.slane %v2508, %v2512
    %v2514 = vlaneseq
    %v2515 = vshrl.u32 %v2514, 7
    %v2516 = vsub.s32 1, %v2515
    %v2517 = vrot.slane %v2508, %v2516
    %v2584 = vunpack.c.l.b16 %v2444
    %v2585 = vunpack.c.h.b16 %v2444
    %v2586 = vunpack.c.l.b16 %v2445
    %v2587 = vunpack.c.h.b16 %v2445
    %v2588 = vunpack.c.l.b16 %v2446
    %v2589 = vunpack.c.h.b16 %v2446
    %v2590 = vunpack.c.l.b16 %v2447
    %v2591 = vunpack.c.h.b16 %v2447
    %v2592 = vunpack.c.l.b16 %v2448
    %v2593 = vunpack.c.h.b16 %v2448
    %v2594 = vunpack.c.l.b16 %v2449
    %v2595 = vunpack.c.h.b16 %v2449
    %v2596 = vunpack.c.l.b16 %v2450
    %v2597 = vunpack.c.h.b16 %v2450
    %v2598 = vunpack.c.l.b16 %v2451
    %v2599 = vunpack.c.h.b16 %v2451
    %v2600 = vunpack.c.l.b16 %v2452
    %v2601 = vunpack.c.h.b16 %v2452
    %v2602 = vunpack.c.l.b16 %v2453
    %v2603 = vunpack.c.h.b16 %v2453
    %v2604 = vunpack.c.l.b16 %v2454
    %v2605 = vunpack.c.h.b16 %v2454
    %v2606 = vunpack.c.l.b16 %v2455
    %v2607 = vunpack.c.h.b16 %v2455
    %v2608 = vunpack.c.l.b16 %v2456
    %v2609 = vunpack.c.h.b16 %v2456
    %v2610 = vunpack.c.l.b16 %v2457
    %v2611 = vunpack.c.h.b16 %v2457
    %v2612 = vunpack.c.l.b16 %v2458
    %v2613 = vunpack.c.h.b16 %v2458
    %v2614 = vunpack.c.l.b16 %v2459
    %v2615 = vunpack.c.h.b16 %v2459
    %v2616 = vunpack.c.l.b16 %v2460
    %v2617 = vunpack.c.h.b16 %v2460
    %v2618 = vunpack.c.l.b16 %v2461
    %v2619 = vunpack.c.h.b16 %v2461
    %v2620 = vunpack.c.l.b16 %v2462
    %v2621 = vunpack.c.h.b16 %v2462
    %v2622 = vunpack.c.l.b16 %v2463
    %v2623 = vunpack.c.h.b16 %v2463
    %v2624 = vunpack.c.l.b16 %v2464
    %v2625 = vunpack.c.h.b16 %v2464
    %v2626 = vunpack.c.l.b16 %v2465
    %v2627 = vunpack.c.h.b16 %v2465
    %v2628 = vunpack.c.l.b16 %v2466
    %v2629 = vunpack.c.h.b16 %v2466
    %v2630 = vunpack.c.l.b16 %v2467
    %v2631 = vunpack.c.h.b16 %v2467
    %v2632 = vunpack.c.l.b16 %v2468
    %v2633 = vunpack.c.h.b16 %v2468
    %v2634 = vunpack.c.l.b16 %v2469
    %v2635 = vunpack.c.h.b16 %v2469
    %v2636 = vunpack.c.l.b16 %v2470
    %v2637 = vunpack.c.h.b16 %v2470
    %v2638 = vunpack.c.l.b16 %v2471
    %v2639 = vunpack.c.h.b16 %v2471
    %v2640 = vunpack.c.l.b16 %v2472
    %v2641 = vunpack.c.h.b16 %v2472
    %v2642 = vunpack.c.l.b16 %v2473
    %v2643 = vunpack.c.h.b16 %v2473
    %v2644 = vunpack.c.l.b16 %v2474
    %v2645 = vunpack.c.h.b16 %v2474
    %v2646 = vunpack.c.l.b16 %v2475
    %v2647 = vunpack.c.h.b16 %v2475
    %v2648 = vunpack.c.l.b16 %v2476
    %v2649 = vunpack.c.h.b16 %v2476
    %v2650 = vunpack.c.l.b16 %v2477
    %v2651 = vunpack.c.h.b16 %v2477
    %v2652 = vunpack.c.l.b16 %v2478
    %v2653 = vunpack.c.h.b16 %v2478
    %v2654 = vunpack.c.l.b16 %v2479
    %v2655 = vunpack.c.h.b16 %v2479
    %v2656 = vunpack.c.l.b16 %v2480
    %v2657 = vunpack.c.h.b16 %v2480
    %v2658 = vunpack.c.l.b16 %v2481
    %v2659 = vunpack.c.h.b16 %v2481
    %v2660 = vunpack.c.l.b16 %v2482
    %v2661 = vunpack.c.h.b16 %v2482
    %v2662 = vunpack.c.l.b16 %v2483
    %v2663 = vunpack.c.h.b16 %v2483
    %v2664 = vunpack.c.l.b16 %v2484
    %v2665 = vunpack.c.h.b16 %v2484
    %v2666 = vunpack.c.l.b16 %v2485
    %v2667 = vunpack.c.h.b16 %v2485
    %v2668 = vunpack.c.l.b16 %v2486
    %v2669 = vunpack.c.h.b16 %v2486
    %v2670 = vunpack.c.l.b16 %v2487
    %v2671 = vunpack.c.h.b16 %v2487
    %v2672 = vunpack.c.l.b16 %v2488
    %v2673 = vunpack.c.h.b16 %v2488
    %v2674 = vunpack.c.l.b16 %v2489
    %v2675 = vunpack.c.h.b16 %v2489
    %v2676 = vunpack.c.l.b16 %v2490
    %v2677 = vunpack.c.h.b16 %v2490
    %v2678 = vunpack.c.l.b16 %v2491
    %v2679 = vunpack.c.h.b16 %v2491
    %v2680 = vunpack.c.l.b16 %v2492
    %v2681 = vunpack.c.h.b16 %v2492
    %v2682 = vunpack.c.l.b16 %v2493
    %v2683 = vunpack.c.h.b16 %v2493
    %v2684 = vunpack.c.l.b16 %v2494
    %v2685 = vunpack.c.h.b16 %v2494
    %v2686 = vunpack.c.l.b16 %v2495
    %v2687 = vunpack.c.h.b16 %v2495
    %v2688 = vunpack.c.l.b16 %v2496
    %v2689 = vunpack.c.h.b16 %v2496
    %v2690 = vunpack.c.l.b16 %v2497
    %v2691 = vunpack.c.h.b16 %v2497
    %v2692 = vunpack.c.l.b16 %v2498
    %v2693 = vunpack.c.h.b16 %v2498
    %v2694 = vunpack.c.l.b16 %v2499
    %v2695 = vunpack.c.h.b16 %v2499
    %v2696 = vunpack.c.l.b16 %v2500
    %v2697 = vunpack.c.h.b16 %v2500
    %v2698 = vunpack.c.l.b16 %v2501
    %v2699 = vunpack.c.h.b16 %v2501
    %v2700 = vunpack.c.l.b16 %v2502
    %v2701 = vunpack.c.h.b16 %v2502
    %v2702 = vunpack.c.l.b16 %v2503
    %v2703 = vunpack.c.h.b16 %v2503
    %v2704 = vunpack.c.l.b16 %v2504
    %v2705 = vunpack.c.h.b16 %v2504
    %v2706 = vunpack.c.l.b16 %v2505
    %v2707 = vunpack.c.h.b16 %v2505
    %v2708 = vunpack.c.l.b16 %v2506
    %v2709 = vunpack.c.h.b16 %v2506
    %v2710 = vunpack.c.l.b16 %v2507
    %v2711 = vunpack.c.h.b16 %v2507
    %v2712 = vpack.c.b16 %v2586, %v2584
    %v2713 = vpack.c.b16 %v2587, %v2585
    %v2714 = vpack.c.b16 %v2590, %v2588
    %v2715 = vpack.c.b16 %v2591, %v2589
    %v2716 = vpack.c.b16 %v2594, %v2592
    %v2717 = vpack.c.b16 %v2595, %v2593
    %v2718 = vpack.c.b16 %v2598, %v2596
    %v2719 = vpack.c.b16 %v2599, %v2597
    %v2720 = vpack.c.b16 %v2602, %v2600
    %v2721 = vpack.c.b16 %v2603, %v2601
    %v2722 = vpack.c.b16 %v2606, %v2604
    %v2723 = vpack.c.b16 %v2607, %v2605
    %v2724 = vpack.c.b16 %v2610, %v2608
    %v2725 = vpack.c.b16 %v2611, %v2609
    %v2726 = vpack.c.b16 %v2614, %v2612
    %v2727 = vpack.c.b16 %v2615, %v2613
    %v2728 = vpack.c.b16 %v2618, %v2616
    %v2729 = vpack.c.b16 %v2619, %v2617
    %v2730 = vpack.c.b16 %v2622, %v2620
    %v2731 = vpack.c.b16 %v2623, %v2621
    %v2732 = vpack.c.b16 %v2626, %v2624
    %v2733 = vpack.c.b16 %v2627, %v2625
    %v2734 = vpack.c.b16 %v2630, %v2628
    %v2735 = vpack.c.b16 %v2631, %v2629
    %v2736 = vpack.c.b16 %v2634, %v2632
    %v2737 = vpack.c.b16 %v2635, %v2633
    %v2738 = vpack.c.b16 %v2638, %v2636
    %v2739 = vpack.c.b16 %v2639, %v2637
    %v2740 = vpack.c.b16 %v2642, %v2640
    %v2741 = vpack.c.b16 %v2643, %v2641
    %v2742 = vpack.c.b16 %v2646, %v2644
    %v2743 = vpack.c.b16 %v2647, %v2645
    %v2744 = vpack.c.b16 %v2650, %v2648
    %v2745 = vpack.c.b16 %v2651, %v2649
    %v2746 = vpack.c.b16 %v2654, %v2652
    %v2747 = vpack.c.b16 %v2655, %v2653
    %v2748 = vpack.c.b16 %v2658, %v2656
    %v2749 = vpack.c.b16 %v2659, %v2657
    %v2750 = vpack.c.b16 %v2662, %v2660
    %v2751 = vpack.c.b16 %v2663, %v2661
    %v2752 = vpack.c.b16 %v2666, %v2664
    %v2753 = vpack.c.b16 %v2667, %v2665
    %v2754 = vpack.c.b16 %v2670, %v2668
    %v2755 = vpack.c.b16 %v2671, %v2669
    %v2756 = vpack.c.b16 %v2674, %v2672
    %v2757 = vpack.c.b16 %v2675, %v2673
    %v2758 = vpack.c.b16 %v2678, %v2676
    %v2759 = vpack.c.b16 %v2679, %v2677
    %v2760 = vpack.c.b16 %v2682, %v2680
    %v2761 = vpack.c.b16 %v2683, %v2681
    %v2762 = vpack.c.b16 %v2686, %v2684
    %v2763 = vpack.c.b16 %v2687, %v2685
    %v2764 = vpack.c.b16 %v2690, %v2688
    %v2765 = vpack.c.b16 %v2691, %v2689
    %v2766 = vpack.c.b16 %v2694, %v2692
    %v2767 = vpack.c.b16 %v2695, %v2693
    %v2768 = vpack.c.b16 %v2698, %v2696
    %v2769 = vpack.c.b16 %v2699, %v2697
    %v2770 = vpack.c.b16 %v2702, %v2700
    %v2771 = vpack.c.b16 %v2703, %v2701
    %v2772 = vpack.c.b16 %v2706, %v2704
    %v2773 = vpack.c.b16 %v2707, %v2705
    %v2774 = vpack.c.b16 %v2710, %v2708
    %v2775 = vpack.c.b16 %v2711, %v2709
    %2840 = vmatprep.subr.bf16.mxu0 %v2713
    %2841 = vmatpush1.bf16.msra.mxu0 %v2712
    %2842 = vmatprep.subr.bf16.mxu0 %v2715
    %2843 = vmatpush1.bf16.msra.mxu0 %v2714
    %2844 = vmatprep.subr.bf16.mxu0 %v2717
    %2845 = vmatpush1.bf16.msra.mxu0 %v2716
    %2846 = vmatprep.subr.bf16.mxu0 %v2719
    %2847 = vmatpush1.bf16.msra.mxu0 %v2718
    %2848 = vmatprep.subr.bf16.mxu0 %v2721
    %2849 = vmatpush1.bf16.msra.mxu0 %v2720
    %2850 = vmatprep.subr.bf16.mxu0 %v2723
    %2851 = vmatpush1.bf16.msra.mxu0 %v2722
    %2852 = vmatprep.subr.bf16.mxu0 %v2725
    %2853 = vmatpush1.bf16.msra.mxu0 %v2724
    %2854 = vmatprep.subr.bf16.mxu0 %v2727
    %2855 = vmatpush1.bf16.msra.mxu0 %v2726
    %2856 = vmatprep.subr.bf16.mxu0 %v2729
    %2857 = vmatpush1.bf16.msra.mxu0 %v2728
    %2858 = vmatprep.subr.bf16.mxu0 %v2731
    %2859 = vmatpush1.bf16.msra.mxu0 %v2730
    %2860 = vmatprep.subr.bf16.mxu0 %v2733
    %2861 = vmatpush1.bf16.msra.mxu0 %v2732
    %2862 = vmatprep.subr.bf16.mxu0 %v2735
    %2863 = vmatpush1.bf16.msra.mxu0 %v2734
    %2864 = vmatprep.subr.bf16.mxu0 %v2737
    %2865 = vmatpush1.bf16.msra.mxu0 %v2736
    %2866 = vmatprep.subr.bf16.mxu0 %v2739
    %2867 = vmatpush1.bf16.msra.mxu0 %v2738
    %2868 = vmatprep.subr.bf16.mxu0 %v2741
    %2869 = vmatpush1.bf16.msra.mxu0 %v2740
    %2870 = vmatprep.subr.bf16.mxu0 %v2743
    %2871 = vmatpush1.bf16.msra.mxu0 %v2742
    %2872 = vmatprep.mubr.bf16.mxu0 %v2441
    %2873 = vmatmul.mubr.bf16.gmra.mrb[0].mxu0 %v2440
    %v2874 = vpop.f32.mrb[0].mxu0
    %v2875 = vadd.f32 %v2513, %v2874
    %v2876 = vpop.f32.mrb[0].mxu0
    %v2877 = vadd.f32 %v2517, %v2876
    %v2878 = vpop.f32.mrb[0].mxu0
    %v2879 = vadd.f32 %v2513, %v2878
    %v2880 = vpop.f32.mrb[0].mxu0
    %v2881 = vadd.f32 %v2517, %v2880
    %2882 = vdwg.mxu0
    %2883 = vmatprep.subr.bf16.mxu0 %v2745
    %2884 = vmatpush1.bf16.msra.mxu0 %v2744
    %2885 = vmatprep.subr.bf16.mxu0 %v2747
    %2886 = vmatpush1.bf16.msra.mxu0 %v2746
    %2887 = vmatprep.subr.bf16.mxu0 %v2749
    %2888 = vmatpush1.bf16.msra.mxu0 %v2748
    %2889 = vmatprep.subr.bf16.mxu0 %v2751
    %2890 = vmatpush1.bf16.msra.mxu0 %v2750
    %2891 = vmatprep.subr.bf16.mxu0 %v2753
    %2892 = vmatpush1.bf16.msra.mxu0 %v2752
    %2893 = vmatprep.subr.bf16.mxu0 %v2755
    %2894 = vmatpush1.bf16.msra.mxu0 %v2754
    %2895 = vmatprep.subr.bf16.mxu0 %v2757
    %2896 = vmatpush1.bf16.msra.mxu0 %v2756
    %2897 = vmatprep.subr.bf16.mxu0 %v2759
    %2898 = vmatpush1.bf16.msra.mxu0 %v2758
    %2899 = vmatprep.subr.bf16.mxu0 %v2761
    %2900 = vmatpush1.bf16.msra.mxu0 %v2760
    %2901 = vmatprep.subr.bf16.mxu0 %v2763
    %2902 = vmatpush1.bf16.msra.mxu0 %v2762
    %2903 = vmatprep.subr.bf16.mxu0 %v2765
    %2904 = vmatpush1.bf16.msra.mxu0 %v2764
    %2905 = vmatprep.subr.bf16.mxu0 %v2767
    %2906 = vmatpush1.bf16.msra.mxu0 %v2766
    %2907 = vmatprep.subr.bf16.mxu0 %v2769
    %2908 = vmatpush1.bf16.msra.mxu0 %v2768
    %2909 = vmatprep.subr.bf16.mxu0 %v2771
    %2910 = vmatpush1.bf16.msra.mxu0 %v2770
    %2911 = vmatprep.subr.bf16.mxu0 %v2773
    %2912 = vmatpush1.bf16.msra.mxu0 %v2772
    %2913 = vmatprep.subr.bf16.mxu0 %v2775
    %2914 = vmatpush1.bf16.msra.mxu0 %v2774
    %2915 = vmatprep.mubr.bf16.mxu0 %v2443
    %2916 = vmatmul.mubr.bf16.gmra.mrb[0].mxu0 %v2442
    %v2917 = vpop.f32.mrb[0].mxu0
    %v2918 = vadd.f32 %v2875, %v2917
    %v2919 = vpop.f32.mrb[0].mxu0
    %v2920 = vadd.f32 %v2877, %v2919
    %v2921 = vpop.f32.mrb[0].mxu0
    %v2922 = vadd.f32 %v2879, %v2921
    %v2923 = vpop.f32.mrb[0].mxu0
    %v2924 = vadd.f32 %v2881, %v2923
    %2925 = vdwg.mxu0
    %v2926 = vmax.f32 %v2918, 0.0
    %v2927 = vmax.f32 %v2920, 0.0
    %v2928 = vmax.f32 %v2922, 0.0
    %v2929 = vmax.f32 %v2924, 0.0
    %v2930 = vpack.c.bf16 %v2928, %v2926
    %v2931 = vpack.c.bf16 %v2929, %v2927
    %v2932 = vld [vmem:[#allocation11] sm:$0xf]
    %v2933 = vld [vmem:[#allocation11 + $0x4] sm:$0xf]
    %v2934 = vld [vmem:[#allocation11 + $0x8] sm:$0xf]
    %v2935 = vld [vmem:[#allocation11 + $0xc] sm:$0xf]
    %v2936 = vld [vmem:[#allocation11 + $0x10] sm:$0xf]
    %v2937 = vld [vmem:[#allocation11 + $0x14] sm:$0xf]
    %v2938 = vld [vmem:[#allocation11 + $0x18] sm:$0xf]
    %v2939 = vld [vmem:[#allocation11 + $0x1c] sm:$0xf]
    %v2940 = vld [vmem:[#allocation11 + $0x20] sm:$0xf]
    %v2941 = vld [vmem:[#allocation11 + $0x24] sm:$0xf]
    %v2942 = vld [vmem:[#allocation11 + $0x28] sm:$0xf]
    %v2943 = vld [vmem:[#allocation11 + $0x2c] sm:$0xf]
    %v2944 = vld [vmem:[#allocation11 + $0x30] sm:$0xf]
    %v2945 = vld [vmem:[#allocation11 + $0x34] sm:$0xf]
    %v2946 = vld [vmem:[#allocation11 + $0x38] sm:$0xf]
    %v2947 = vld [vmem:[#allocation11 + $0x3c] sm:$0xf]
    %v2948 = vld [vmem:[#allocation11 + $0x40] sm:$0xf]
    %v2949 = vld [vmem:[#allocation11 + $0x44] sm:$0xf]
    %v2950 = vld [vmem:[#allocation11 + $0x48] sm:$0xf]
    %v2951 = vld [vmem:[#allocation11 + $0x4c] sm:$0xf]
    %v2952 = vld [vmem:[#allocation11 + $0x50] sm:$0xf]
    %v2953 = vld [vmem:[#allocation11 + $0x54] sm:$0xf]
    %v2954 = vld [vmem:[#allocation11 + $0x58] sm:$0xf]
    %v2955 = vld [vmem:[#allocation11 + $0x5c] sm:$0xf]
    %v2956 = vld [vmem:[#allocation11 + $0x60] sm:$0xf]
    %v2957 = vld [vmem:[#allocation11 + $0x64] sm:$0xf]
    %v2958 = vld [vmem:[#allocation11 + $0x68] sm:$0xf]
    %v2959 = vld [vmem:[#allocation11 + $0x6c] sm:$0xf]
    %v2960 = vld [vmem:[#allocation11 + $0x70] sm:$0xf]
    %v2961 = vld [vmem:[#allocation11 + $0x74] sm:$0xf]
    %v2962 = vld [vmem:[#allocation11 + $0x78] sm:$0xf]
    %v2963 = vld [vmem:[#allocation11 + $0x7c] sm:$0xf]
    %v2964 = vld [vmem:[%s8] sm:$0x1]
    %v2966 = vlaneseq
    %v2967 = vshrl.u32 %v2966, 7
    %v2968 = vsub.s32 0, %v2967
    %v2969 = vrot.slane %v2964, %v2968
    %v3003 = vunpack.c.l.b16 %v2932
    %v3004 = vunpack.c.l.b16 %v2933
    %v3005 = vunpack.c.l.b16 %v2934
    %v3006 = vunpack.c.l.b16 %v2935
    %v3007 = vunpack.c.l.b16 %v2936
    %v3008 = vunpack.c.l.b16 %v2937
    %v3009 = vunpack.c.l.b16 %v2938
    %v3010 = vunpack.c.l.b16 %v2939
    %v3011 = vunpack.c.l.b16 %v2940
    %v3012 = vunpack.c.l.b16 %v2941
    %v3013 = vunpack.c.l.b16 %v2942
    %v3014 = vunpack.c.l.b16 %v2943
    %v3015 = vunpack.c.l.b16 %v2944
    %v3016 = vunpack.c.l.b16 %v2945
    %v3017 = vunpack.c.l.b16 %v2946
    %v3018 = vunpack.c.l.b16 %v2947
    %v3019 = vunpack.c.l.b16 %v2948
    %v3020 = vunpack.c.l.b16 %v2949
    %v3021 = vunpack.c.l.b16 %v2950
    %v3022 = vunpack.c.l.b16 %v2951
    %v3023 = vunpack.c.l.b16 %v2952
    %v3024 = vunpack.c.l.b16 %v2953
    %v3025 = vunpack.c.l.b16 %v2954
    %v3026 = vunpack.c.l.b16 %v2955
    %v3027 = vunpack.c.l.b16 %v2956
    %v3028 = vunpack.c.l.b16 %v2957
    %v3029 = vunpack.c.l.b16 %v2958
    %v3030 = vunpack.c.l.b16 %v2959
    %v3031 = vunpack.c.l.b16 %v2960
    %v3032 = vunpack.c.l.b16 %v2961
    %v3033 = vunpack.c.l.b16 %v2962
    %v3034 = vunpack.c.l.b16 %v2963
    %v3035 = vpack.c.b16 %v3004, %v3003
    %v3036 = vpack.c.b16 %v3006, %v3005
    %v3037 = vpack.c.b16 %v3008, %v3007
    %v3038 = vpack.c.b16 %v3010, %v3009
    %v3039 = vpack.c.b16 %v3012, %v3011
    %v3040 = vpack.c.b16 %v3014, %v3013
    %v3041 = vpack.c.b16 %v3016, %v3015
    %v3042 = vpack.c.b16 %v3018, %v3017
    %v3043 = vpack.c.b16 %v3020, %v3019
    %v3044 = vpack.c.b16 %v3022, %v3021
    %v3045 = vpack.c.b16 %v3024, %v3023
    %v3046 = vpack.c.b16 %v3026, %v3025
    %v3047 = vpack.c.b16 %v3028, %v3027
    %v3048 = vpack.c.b16 %v3030, %v3029
    %v3049 = vpack.c.b16 %v3032, %v3031
    %v3050 = vpack.c.b16 %v3034, %v3033
    %3067 = vmatprep.subr.bf16.mxu0 0
    %3068 = vmatpush1.bf16.msra.mxu0 %v3035
    %3069 = vmatprep.subr.bf16.mxu0 0
    %3070 = vmatpush1.bf16.msra.mxu0 %v3036
    %3071 = vmatprep.subr.bf16.mxu0 0
    %3072 = vmatpush1.bf16.msra.mxu0 %v3037
    %3073 = vmatprep.subr.bf16.mxu0 0
    %3074 = vmatpush1.bf16.msra.mxu0 %v3038
    %3075 = vmatprep.subr.bf16.mxu0 0
    %3076 = vmatpush1.bf16.msra.mxu0 %v3039
    %3077 = vmatprep.subr.bf16.mxu0 0
    %3078 = vmatpush1.bf16.msra.mxu0 %v3040
    %3079 = vmatprep.subr.bf16.mxu0 0
    %3080 = vmatpush1.bf16.msra.mxu0 %v3041
    %3081 = vmatprep.subr.bf16.mxu0 0
    %3082 = vmatpush1.bf16.msra.mxu0 %v3042
    %3083 = vmatprep.subr.bf16.mxu0 0
    %3084 = vmatpush1.bf16.msra.mxu0 %v3043
    %3085 = vmatprep.subr.bf16.mxu0 0
    %3086 = vmatpush1.bf16.msra.mxu0 %v3044
    %3087 = vmatprep.subr.bf16.mxu0 0
    %3088 = vmatpush1.bf16.msra.mxu0 %v3045
    %3089 = vmatprep.subr.bf16.mxu0 0
    %3090 = vmatpush1.bf16.msra.mxu0 %v3046
    %3091 = vmatprep.subr.bf16.mxu0 0
    %3092 = vmatpush1.bf16.msra.mxu0 %v3047
    %3093 = vmatprep.subr.bf16.mxu0 0
    %3094 = vmatpush1.bf16.msra.mxu0 %v3048
    %3095 = vmatprep.subr.bf16.mxu0 0
    %3096 = vmatpush1.bf16.msra.mxu0 %v3049
    %3097 = vmatprep.subr.bf16.mxu0 0
    %3098 = vmatpush1.bf16.msra.mxu0 %v3050
    %3099 = vmatprep.mubr.bf16.mxu0 %v2931
    %3100 = vmatmul.mubr.bf16.gmra.mrb[0].mxu0 %v2930
    %v3101 = vpop.f32.mrb[0].mxu0
    %v3102 = vadd.f32 %v2969, %v3101
    %v3103 = vpop.f32.mrb[0].mxu0
    %v3104 = vpop.f32.mrb[0].mxu0
    %v3105 = vadd.f32 %v2969, %v3104
    %v3106 = vpop.f32.mrb[0].mxu0
    %3107 = vdwg.mxu0
    %v3108 = vmax.f32 %v3102, 0.0
    %v3109 = vmax.f32 %v3105, 0.0
    %v3110 = vpack.c.bf16 %v3109, %v3108
    %v3111 = vld [vmem:[#allocation13] sm:$0xf]
    %v3112 = vld [vmem:[#allocation13 + $0x4] sm:$0xf]
    %v3113 = vld [vmem:[#allocation13 + $0x8] sm:$0xf]
    %v3114 = vld [vmem:[#allocation13 + $0xc] sm:$0xf]
    %v3115 = vld [vmem:[#allocation13 + $0x10] sm:$0xf]
    %v3116 = vld [vmem:[#allocation13 + $0x14] sm:$0xf]
    %v3117 = vld [vmem:[#allocation13 + $0x18] sm:$0xf]
    %v3118 = vld [vmem:[#allocation13 + $0x1c] sm:$0xf]
    %v3119 = vld [vmem:[#allocation13 + $0x20] sm:$0xf]
    %v3120 = vld [vmem:[#allocation13 + $0x24] sm:$0xf]
    %v3121 = vld [vmem:[#allocation13 + $0x28] sm:$0xf]
    %v3122 = vld [vmem:[#allocation13 + $0x2c] sm:$0xf]
    %v3123 = vld [vmem:[#allocation13 + $0x30] sm:$0xf]
    %v3124 = vld [vmem:[#allocation13 + $0x34] sm:$0xf]
    %v3125 = vld [vmem:[#allocation13 + $0x38] sm:$0xf]
    %v3126 = vld [vmem:[#allocation13 + $0x3c] sm:$0xf]
    %v3127 = vld [vmem:[%s10] sm:$0x1]
    %v3129 = vlaneseq
    %v3130 = vshrl.u32 %v3129, 7
    %v3131 = vsub.s32 0, %v3130
    %v3132 = vrot.slane %v3127, %v3131
    %v3150 = vunpack.c.l.b16 %v3111
    %v3151 = vunpack.c.l.b16 %v3112
    %v3152 = vunpack.c.l.b16 %v3113
    %v3153 = vunpack.c.l.b16 %v3114
    %v3154 = vunpack.c.l.b16 %v3115
    %v3155 = vunpack.c.l.b16 %v3116
    %v3156 = vunpack.c.l.b16 %v3117
    %v3157 = vunpack.c.l.b16 %v3118
    %v3158 = vunpack.c.l.b16 %v3119
    %v3159 = vunpack.c.l.b16 %v3120
    %v3160 = vunpack.c.l.b16 %v3121
    %v3161 = vunpack.c.l.b16 %v3122
    %v3162 = vunpack.c.l.b16 %v3123
    %v3163 = vunpack.c.l.b16 %v3124
    %v3164 = vunpack.c.l.b16 %v3125
    %v3165 = vunpack.c.l.b16 %v3126
    %v3166 = vpack.c.b16 %v3151, %v3150
    %v3167 = vpack.c.b16 %v3153, %v3152
    %v3168 = vpack.c.b16 %v3155, %v3154
    %v3169 = vpack.c.b16 %v3157, %v3156
    %v3170 = vpack.c.b16 %v3159, %v3158
    %v3171 = vpack.c.b16 %v3161, %v3160
    %v3172 = vpack.c.b16 %v3163, %v3162
    %v3173 = vpack.c.b16 %v3165, %v3164
    %3182 = vmatprep.subr.bf16.mxu0 0
    %3183 = vmatpush1.bf16.msra.mxu0 %v3166
    %3184 = vmatprep.subr.bf16.mxu0 0
    %3185 = vmatpush1.bf16.msra.mxu0 %v3167
    %3186 = vmatprep.subr.bf16.mxu0 0
    %3187 = vmatpush1.bf16.msra.mxu0 %v3168
    %3188 = vmatprep.subr.bf16.mxu0 0
    %3189 = vmatpush1.bf16.msra.mxu0 %v3169
    %3190 = vmatprep.subr.bf16.mxu0 0
    %3191 = vmatpush1.bf16.msra.mxu0 %v3170
    %3192 = vmatprep.subr.bf16.mxu0 0
    %3193 = vmatpush1.bf16.msra.mxu0 %v3171
    %3194 = vmatprep.subr.bf16.mxu0 0
    %3195 = vmatpush1.bf16.msra.mxu0 %v3172
    %3196 = vmatprep.subr.bf16.mxu0 0
    %3197 = vmatpush1.bf16.msra.mxu0 %v3173
    %3198 = vmatprep.subr.bf16.mxu0 0
    %3199 = vmatpush1.bf16.msra.mxu0 0
    %3200 = vmatprep.subr.bf16.mxu0 0
    %3201 = vmatpush1.bf16.msra.mxu0 0
    %3202 = vmatprep.subr.bf16.mxu0 0
    %3203 = vmatpush1.bf16.msra.mxu0 0
    %3204 = vmatprep.subr.bf16.mxu0 0
    %3205 = vmatpush1.bf16.msra.mxu0 0
    %3206 = vmatprep.subr.bf16.mxu0 0
    %3207 = vmatpush1.bf16.msra.mxu0 0
    %3208 = vmatprep.subr.bf16.mxu0 0
    %3209 = vmatpush1.bf16.msra.mxu0 0
    %3210 = vmatprep.subr.bf16.mxu0 0
    %3211 = vmatpush1.bf16.msra.mxu0 0
    %3212 = vmatprep.subr.bf16.mxu0 0
    %3213 = vmatpush1.bf16.msra.mxu0 0
    %3214 = vmatprep.mubr.bf16.mxu0 0
    %3215 = vmatmul.mubr.bf16.gmra.mrb[0].mxu0 %v3110
    %v3216 = vpop.f32.mrb[0].mxu0
    %v3217 = vadd.f32 %v3132, %v3216
    %v3218 = vpop.f32.mrb[0].mxu0
    %v3219 = vpop.f32.mrb[0].mxu0
    %v3220 = vadd.f32 %v3132, %v3219
    %v3221 = vpop.f32.mrb[0].mxu0
    %3222 = vdwg.mxu0
    %3223 = vst [vmem:[#allocation14] sm:$0xff] %v3217
    %3224 = vst [vmem:[#allocation14 + $0x8] sm:$0xff] %v3220
    // Predicated region
    $region74: #{tpu_custom_call.1} parent=1 // pred_check
      _
    $region75: #{tpu_custom_call.1} parent=1 // pred_check_branch
      %3226 = sbr.rel (0) target = $region77
    $region76: #{tpu_custom_call.1} parent=1 // pred_region
      %s3228 = ssub.s32 256, 256
      %3229 = vsyncadd [#allocation4], %s3228
      %s3230 = sshll.u32 [#allocation14], 4
      %s3231 = int_to_ptr.vmem [resolvable:$true] %s3230
      %3236 = dma.vmem_to_hbm [thread:$0]  %s3231, 256, %s11, [#allocation4], 128, 128, 8
    $region77: #{tpu_custom_call.1} parent=1 // pred_fallthru
      _
    // Predicated region
    $region78: #{tpu_custom_call.1} parent=1 // pred_check
      _
    $region79: #{tpu_custom_call.1} parent=1 // pred_check_branch
      %3238 = sbr.rel (0) target = $region81
    $region80: #{tpu_custom_call.1} parent=1 // pred_region
      %3239 = dma.done [#allocation4], 256
    $region81: #{tpu_custom_call.1} parent=1 // pred_fallthru
      _
    %3240 = vsyncpa [#allocation3], 1
    %3241 = vsyncpa [#allocation6], 1
    %3242 = vsyncpa [#allocation9], 1
    %3243 = vsyncpa [#allocation12], 1
    %3244 = vsyncpa [#allocation4], 1

</llo_original>
